<compile_context>
chip_gen: v5e
topology: v5e:2x2
jax: 0.10.0
libtpu: 0.0.40
codegen_flags: <defaults>
</compile_context>

<pallas_src>
import functools

import jax
import jax.numpy as jnp
import numpy as np
from jax.experimental import pallas as pl
from jax.experimental.pallas import tpu as pltpu

EPS = 1e-5


def linear_attn_ffn_kernel(x_ref, wqkv_ref, bqkv_ref, wout_ref, bout_ref,
                           w1_ref, b1_ref, w2_ref, b2_ref, out_ref,
                           *, patch_area):
    BT, C, PN = x_ref.shape
    P = patch_area
    N = PN // P
    Cq = wqkv_ref.shape[0]
    F = w1_ref.shape[0]
    cdt = wqkv_ref.dtype                       # MXU operand dtype (bf16 or f32)
    inv_n = 1.0 / (C * PN)

    # ---- hoisted out of the batch loop: weights + bias lane-broadcasts -------
    wqkv = wqkv_ref[...]
    wout = wout_ref[...]
    w1 = w1_ref[...]
    w2 = w2_ref[...]
    bqkv = jnp.broadcast_to(bqkv_ref[...], (Cq, PN))
    bout = jnp.broadcast_to(bout_ref[...], (C, PN))
    b1 = jnp.broadcast_to(b1_ref[...], (F, PN))
    b2 = jnp.broadcast_to(b2_ref[...], (C, PN))

    def body(b, carry):
        x = x_ref[b].astype(jnp.float32)                      # (C, PN) lane-dense

        # ---- pre_norm_attn GroupNorm (affine folded into wqkv/bqkv) ----------
        mean1 = jnp.sum(x, keepdims=True) * inv_n              # (1, 1)
        d1 = x - mean1
        var1 = jnp.sum(d1 * d1, keepdims=True) * inv_n
        gn1 = d1 * jax.lax.rsqrt(var1 + EPS)

        # ---- fused QKV projection: rows are [k | v | q | zero-pad] -----------
        qkv = jnp.dot(wqkv, gn1.astype(cdt),
                      preferred_element_type=jnp.float32) + bqkv   # (Cq, PN) f32
        k = qkv[0:C]                                           # (C, PN)
        rv = jnp.maximum(qkv[C:2 * C], 0.0)                    # ReLU(v), (C, PN)
        q = qkv[2 * C:2 * C + 1]                               # (1, PN)

        # ---- per-patch softmax over N + context reduction ---------------------
        # Static lane-tile chunks: XLU reduce + lane-broadcast multiply; no MXU,
        # no selector constants, and a per-patch max keeps denom >= 1.
        parts = []
        for p in range(P):
            sl = slice(p * N, (p + 1) * N)
            qp = q[:, sl]                                      # (1, N)
            ep = jnp.exp(qp - jnp.max(qp, keepdims=True))      # (1, N)
            denom = jnp.sum(ep, keepdims=True)                 # (1, 1), >= 1
            kc = jnp.sum(k[:, sl] * ep, axis=-1, keepdims=True)   # (C, 1)
            parts.append(rv[:, sl] * (kc / denom))             # (C, N)
        attn_in = jnp.concatenate(parts, axis=-1)              # (C, PN)

        attn = jnp.dot(wout, attn_in.astype(cdt),
                       preferred_element_type=jnp.float32) + bout
        x1 = x + attn                                          # first residual
        # TODO(synk): attn_dropout / dropout are identity (eval mode only).

        # ---- pre_norm_ffn GroupNorm (affine folded into w1/b1) ---------------
        mean2 = jnp.sum(x1, keepdims=True) * inv_n
        d2 = x1 - mean2
        var2 = jnp.sum(d2 * d2, keepdims=True) * inv_n
        gn2 = d2 * jax.lax.rsqrt(var2 + EPS)

        h = jnp.dot(w1, gn2.astype(cdt),
                    preferred_element_type=jnp.float32) + b1
        h = h * jax.nn.sigmoid(h)                              # SiLU (f32)
        ffn = jnp.dot(w2, h.astype(cdt),
                      preferred_element_type=jnp.float32) + b2

        out_ref[b] = (x1 + ffn).astype(out_ref.dtype)          # second residual
        return carry

    jax.lax.fori_loop(0, BT, body, 0)


def prepare_params(params, dtype=jnp.bfloat16):
    """One-time constant transforms: GroupNorm-affine folding + QKV row fusion.

    `dtype` is the MXU-operand dtype for the 1x1-conv weights (bf16 is the
    v6e/v7x fast path; pass jnp.float32 for bit-tighter accuracy). Biases stay
    f32 (added post-accumulation); all elementwise math is f32 in the kernel.
    """
    C = params['wout'].shape[0]
    F = params['w1'].shape[0]

    wqkv, bqkv = params['wqkv'], params['bqkv']        # rows: [q | k | v]
    g1, be1 = params['gn1_g'], params['gn1_b']
    g2, be2 = params['gn2_g'], params['gn2_b']

    # reorder rows to [k | v | q] (sublane-aligned slices in the kernel), then
    # fold GroupNorm#1 affine:  b' = b + W @ beta,  W' = W * diag(gamma).
    w_kvq = jnp.concatenate([wqkv[1:1 + C], wqkv[1 + C:], wqkv[0:1]], axis=0)
    b_kvq = jnp.concatenate([bqkv[1:1 + C], bqkv[1 + C:], bqkv[0:1]], axis=0)
    b_kvq = b_kvq + w_kvq @ be1
    w_kvq = w_kvq * g1[None, :]

    # zero-pad output rows to a sublane multiple of 8.
    Cq = ((2 * C + 1 + 7) // 8) * 8
    pad = Cq - (2 * C + 1)
    w_kvq = jnp.concatenate([w_kvq, jnp.zeros((pad, C), w_kvq.dtype)], axis=0)
    b_kvq = jnp.concatenate([b_kvq, jnp.zeros((pad,), b_kvq.dtype)], axis=0)

    # fold GroupNorm#2 affine into the first FFN conv.
    b1_f = params['b1'] + params['w1'] @ be2
    w1_f = params['w1'] * g2[None, :]

    f32 = jnp.float32
    return {
        'wqkv': w_kvq.astype(dtype), 'bqkv': b_kvq.astype(f32).reshape(Cq, 1),
        'wout': params['wout'].astype(dtype), 'bout': params['bout'].astype(f32).reshape(C, 1),
        'w1': w1_f.astype(dtype), 'b1': b1_f.astype(f32).reshape(F, 1),
        'w2': params['w2'].astype(dtype), 'b2': params['b2'].astype(f32).reshape(C, 1),
    }


def _default_batch_tile(B):
    # Prefer large tiles (amortize per-step overhead) while keeping >= 2 grid
    # steps so v7x's two TensorCores each get pipelined work.
    for cand in (32, 16, 8, 4, 2):
        if B % cand == 0 and B // cand >= 2:
            return cand
    return 1


def linear_attn_ffn(x, prep, *, bt=None):
    B, C, P, N = x.shape
    PN = P * N
    if bt is None:
        bt = _default_batch_tile(B)
    assert B % bt == 0, "batch must be divisible by the batch tile bt"

    x2 = x.reshape(B, C, PN)          # free row-major reshape in the wrapper

    weight_keys = ['wqkv', 'bqkv', 'wout', 'bout', 'w1', 'b1', 'w2', 'b2']
    weight_args = [prep[k] for k in weight_keys]
    Cq = prep['wqkv'].shape[0]
    F = prep['w1'].shape[0]

    def const_map(ndim):
        return lambda i: (0,) * ndim

    in_specs = ([pl.BlockSpec((bt, C, PN), lambda i: (i, 0, 0))]
                + [pl.BlockSpec(a.shape, const_map(a.ndim)) for a in weight_args])
    out_spec = pl.BlockSpec((bt, C, PN), lambda i: (i, 0, 0))

    # advisory cost estimate (the four dense 1x1 convs dominate)
    flops = int(2 * B * PN * C * (Cq + C + 2 * F))
    transc = int(B * ((F + 1) * PN + 2))                    # sigmoid + exp + rsqrt
    const_bytes = sum(int(a.size) * a.dtype.itemsize for a in weight_args)
    bytes_acc = int(2 * x.size * x.dtype.itemsize + const_bytes)

    # VMEM budget from actual buffer sizes (do NOT claim the whole v7x VMEM)
    slab = C * PN * 4                                       # one f32 (C, PN) slab
    vmem_limit = int(min(
        4 * bt * slab                        # in + out blocks, double-buffered
        + 2 * const_bytes                    # resident weights / biases
        + (Cq + 2 * C + F) * PN * 4          # hoisted bias lane-broadcasts
        + 16 * slab + (Cq + 2 * F) * PN * 4  # per-sample temporaries (generous)
        + 8 * 1024 * 1024,                   # compiler-internal scratch headroom
        32 * 1024 * 1024))

    kernel = functools.partial(linear_attn_ffn_kernel, patch_area=P)

    y2 = pl.pallas_call(
        kernel,
        out_shape=jax.ShapeDtypeStruct((B, C, PN), x.dtype),
        grid_spec=pltpu.PrefetchScalarGridSpec(
            num_scalar_prefetch=0,
            grid=(B // bt,),
            in_specs=in_specs,
            out_specs=out_spec,
        ),
        compiler_params=pltpu.CompilerParams(
            dimension_semantics=("parallel",),
            vmem_limit_bytes=vmem_limit),
        cost_estimate=pl.CostEstimate(flops=flops, transcendentals=transc,
                                      bytes_accessed=bytes_acc),
    )(x2, *weight_args)
    return y2.reshape(B, C, P, N)


def init_params(key, embed_dim, ffn_latent_dim, dtype=jnp.float32):
    """Raw PyTorch-equivalent parameters (q first in wqkv, like torch.split)."""
    C, F = embed_dim, ffn_latent_dim
    ks = jax.random.split(key, 12)
    s = 0.1
    return {
        'gn1_g': 1.0 + s * jax.random.normal(ks[0], (C,), dtype),
        'gn1_b': s * jax.random.normal(ks[1], (C,), dtype),
        'gn2_g': 1.0 + s * jax.random.normal(ks[2], (C,), dtype),
        'gn2_b': s * jax.random.normal(ks[3], (C,), dtype),
        'wqkv': s * jax.random.normal(ks[4], (1 + 2 * C, C), dtype),
        'bqkv': s * jax.random.normal(ks[5], (1 + 2 * C,), dtype),
        'wout': s * jax.random.normal(ks[6], (C, C), dtype),
        'bout': s * jax.random.normal(ks[7], (C,), dtype),
        'w1': s * jax.random.normal(ks[8], (F, C), dtype),
        'b1': s * jax.random.normal(ks[9], (F,), dtype),
        'w2': s * jax.random.normal(ks[10], (C, F), dtype),
        'b2': s * jax.random.normal(ks[11], (C,), dtype),
    }


def reference(x, p):
    """Pure-JAX mirror of the PyTorch forward (NCHW, eval mode), all f32."""
    B, C, P, N = x.shape

    def groupnorm(z, g, b):
        m = jnp.mean(z, axis=(1, 2, 3), keepdims=True)
        v = jnp.mean((z - m) ** 2, axis=(1, 2, 3), keepdims=True)
        zn = (z - m) / jnp.sqrt(v + EPS)
        return zn * g.reshape(1, C, 1, 1) + b.reshape(1, C, 1, 1)

    def conv1x1(z, w, b):
        return jnp.einsum('oi,bipn->bopn', w, z) + b.reshape(1, -1, 1, 1)

    gn1 = groupnorm(x, p['gn1_g'], p['gn1_b'])
    qkv = conv1x1(gn1, p['wqkv'], p['bqkv'])
    q, k, v = qkv[:, :1], qkv[:, 1:1 + C], qkv[:, 1 + C:]
    cs = jax.nn.softmax(q, axis=-1)
    cv = jnp.sum(k * cs, axis=-1, keepdims=True)
    out = jax.nn.relu(v) * cv
    attn = conv1x1(out, p['wout'], p['bout'])
    x1 = x + attn

    gn2 = groupnorm(x1, p['gn2_g'], p['gn2_b'])
    h = conv1x1(gn2, p['w1'], p['b1'])
    h = h * jax.nn.sigmoid(h)
    ffn = conv1x1(h, p['w2'], p['b2'])
    return x1 + ffn


if __name__ == "__main__":
    B, C, P, N = 16, 16, 8, 128        # batch, embed_dim, patch_area, num_patches
    FFN = 32                           # ffn_latent_dim

    key = jax.random.PRNGKey(0)
    kx, kp = jax.random.split(key)
    x = jax.random.normal(kx, (B, C, P, N), jnp.float32)
    params = init_params(kp, C, FFN)

    # bf16 MXU operands (v6e/v7x fast path); f32 accumulation + f32 elementwise.
    prep = prepare_params(params, dtype=jnp.bfloat16)

    # bt=4 -> grid=4: amortizes the per-grid-step overhead and keeps an even
    # grid with >= 2 steps per TensorCore for v7x megacore sharding.
    y = linear_attn_ffn(x, prep, bt=4)
    y = jax.block_until_ready(y)

    y_ref = reference(x, params)
    # bf16 matmul operands -> loosened tolerance; prepare_params(dtype=f32)
    # achieves 2e-3 against the same reference.
    np.testing.assert_allclose(np.asarray(y), np.asarray(y_ref),
                               rtol=2e-2, atol=2e-2)
    print("KERNEL_OK")
</pallas_src>

<mosaic_0001>
module attributes {stable_mosaic.version = 11 : i64} {
  func.func @linear_attn_ffn_kernel(%arg0: i32, %arg1: memref<4x16x1024xf32, #tpu.memory_space<vmem>>, %arg2: memref<40x16xbf16, #tpu.memory_space<vmem>>, %arg3: memref<40x1xf32, #tpu.memory_space<vmem>>, %arg4: memref<16x16xbf16, #tpu.memory_space<vmem>>, %arg5: memref<16x1xf32, #tpu.memory_space<vmem>>, %arg6: memref<32x16xbf16, #tpu.memory_space<vmem>>, %arg7: memref<32x1xf32, #tpu.memory_space<vmem>>, %arg8: memref<16x32xbf16, #tpu.memory_space<vmem>>, %arg9: memref<16x1xf32, #tpu.memory_space<vmem>>, %arg10: memref<4x16x1024xf32, #tpu.memory_space<vmem>>) attributes {dimension_semantics = [#tpu.dimension_semantics<parallel>], iteration_bounds = array<i64: 4>, scalar_prefetch = 0 : i64, scratch_operands = 0 : i64, tpu.core_type = #tpu.core_type<tc>, window_params = [{transform_indices = @transform_0, window_bounds = array<i64: 4, 16, 1024>}, {pipeline_mode = #tpu.pipeline_mode<synchronous>, transform_indices = @transform_1, window_bounds = array<i64: 40, 16>}, {pipeline_mode = #tpu.pipeline_mode<synchronous>, transform_indices = @transform_2, window_bounds = array<i64: 40, 1>}, {pipeline_mode = #tpu.pipeline_mode<synchronous>, transform_indices = @transform_3, window_bounds = array<i64: 16, 16>}, {pipeline_mode = #tpu.pipeline_mode<synchronous>, transform_indices = @transform_4, window_bounds = array<i64: 16, 1>}, {pipeline_mode = #tpu.pipeline_mode<synchronous>, transform_indices = @transform_5, window_bounds = array<i64: 32, 16>}, {pipeline_mode = #tpu.pipeline_mode<synchronous>, transform_indices = @transform_6, window_bounds = array<i64: 32, 1>}, {pipeline_mode = #tpu.pipeline_mode<synchronous>, transform_indices = @transform_7, window_bounds = array<i64: 16, 32>}, {pipeline_mode = #tpu.pipeline_mode<synchronous>, transform_indices = @transform_8, window_bounds = array<i64: 16, 1>}, {transform_indices = @transform_9, window_bounds = array<i64: 4, 16, 1024>}]} {
    %c0 = arith.constant 0 : index
    %c0_0 = arith.constant 0 : index
    %0 = vector.load %arg2[%c0, %c0_0] : memref<40x16xbf16, #tpu.memory_space<vmem>>, vector<40x16xbf16>
    %c0_1 = arith.constant 0 : index
    %c0_2 = arith.constant 0 : index
    %1 = vector.load %arg4[%c0_1, %c0_2] : memref<16x16xbf16, #tpu.memory_space<vmem>>, vector<16x16xbf16>
    %c0_3 = arith.constant 0 : index
    %c0_4 = arith.constant 0 : index
    %2 = vector.load %arg6[%c0_3, %c0_4] : memref<32x16xbf16, #tpu.memory_space<vmem>>, vector<32x16xbf16>
    %c0_5 = arith.constant 0 : index
    %c0_6 = arith.constant 0 : index
    %3 = vector.load %arg8[%c0_5, %c0_6] : memref<16x32xbf16, #tpu.memory_space<vmem>>, vector<16x32xbf16>
    %c0_7 = arith.constant 0 : index
    %c0_8 = arith.constant 0 : index
    %4 = vector.load %arg3[%c0_7, %c0_8] : memref<40x1xf32, #tpu.memory_space<vmem>>, vector<40x1xf32>
    %5 = vector.shape_cast %4 : vector<40x1xf32> to vector<40x1xf32>
    %6 = vector.broadcast %5 : vector<40x1xf32> to vector<40x1024xf32>
    %c0_9 = arith.constant 0 : index
    %c0_10 = arith.constant 0 : index
    %7 = vector.load %arg5[%c0_9, %c0_10] : memref<16x1xf32, #tpu.memory_space<vmem>>, vector<16x1xf32>
    %8 = vector.shape_cast %7 : vector<16x1xf32> to vector<16x1xf32>
    %9 = vector.broadcast %8 : vector<16x1xf32> to vector<16x1024xf32>
    %c0_11 = arith.constant 0 : index
    %c0_12 = arith.constant 0 : index
    %10 = vector.load %arg7[%c0_11, %c0_12] : memref<32x1xf32, #tpu.memory_space<vmem>>, vector<32x1xf32>
    %11 = vector.shape_cast %10 : vector<32x1xf32> to vector<32x1xf32>
    %12 = vector.broadcast %11 : vector<32x1xf32> to vector<32x1024xf32>
    %c0_13 = arith.constant 0 : index
    %c0_14 = arith.constant 0 : index
    %13 = vector.load %arg9[%c0_13, %c0_14] : memref<16x1xf32, #tpu.memory_space<vmem>>, vector<16x1xf32>
    %14 = vector.shape_cast %13 : vector<16x1xf32> to vector<16x1xf32>
    %15 = vector.broadcast %14 : vector<16x1xf32> to vector<16x1024xf32>
    %c0_i32 = arith.constant 0 : i32
    %c4_i32 = arith.constant 4 : i32
    %16 = arith.addi %c0_i32, %c4_i32 : i32
    %c1_i32 = arith.constant 1 : i32
    scf.for %arg11 = %c0_i32 to %16 step %c1_i32  : i32 {
      %17 = arith.index_cast %arg11 : i32 to index
      %c0_16 = arith.constant 0 : index
      %c0_17 = arith.constant 0 : index
      %18 = vector.load %arg1[%17, %c0_16, %c0_17] : memref<4x16x1024xf32, #tpu.memory_space<vmem>>, vector<1x16x1024xf32>
      %19 = vector.shape_cast %18 : vector<1x16x1024xf32> to vector<16x1024xf32>
      %20 = vector.shape_cast %19 : vector<16x1024xf32> to vector<1x16x1024xf32>
      %cst = arith.constant dense<0.000000e+00> : vector<1xf32>
      %21 = vector.multi_reduction <add>, %20, %cst [1, 2] : vector<1x16x1024xf32> to vector<1xf32>
      %22 = vector.shape_cast %21 : vector<1xf32> to vector<1x1x1xf32>
      %23 = vector.extract %22[0, 0, 0] : f32 from vector<1x1x1xf32>
      %24 = vector.broadcast %23 : f32 to vector<1x1xf32>
      %cst_18 = arith.constant 6.10351563E-5 : f32
      %25 = vector.broadcast %cst_18 : f32 to vector<1x1xf32>
      %26 = arith.mulf %24, %25 : vector<1x1xf32>
      %27 = vector.broadcast %26 : vector<1x1xf32> to vector<16x1024xf32>
      %28 = arith.subf %19, %27 : vector<16x1024xf32>
      %29 = arith.mulf %28, %28 : vector<16x1024xf32>
      %30 = vector.shape_cast %29 : vector<16x1024xf32> to vector<1x16x1024xf32>
      %cst_19 = arith.constant dense<0.000000e+00> : vector<1xf32>
      %31 = vector.multi_reduction <add>, %30, %cst_19 [1, 2] : vector<1x16x1024xf32> to vector<1xf32>
      %32 = vector.shape_cast %31 : vector<1xf32> to vector<1x1x1xf32>
      %33 = vector.extract %32[0, 0, 0] : f32 from vector<1x1x1xf32>
      %34 = vector.broadcast %33 : f32 to vector<1x1xf32>
      %cst_20 = arith.constant 6.10351563E-5 : f32
      %35 = vector.broadcast %cst_20 : f32 to vector<1x1xf32>
      %36 = arith.mulf %34, %35 : vector<1x1xf32>
      %cst_21 = arith.constant 9.99999974E-6 : f32
      %37 = vector.broadcast %cst_21 : f32 to vector<1x1xf32>
      %38 = arith.addf %36, %37 : vector<1x1xf32>
      %39 = math.rsqrt %38 : vector<1x1xf32>
      %40 = vector.broadcast %39 : vector<1x1xf32> to vector<16x1024xf32>
      %41 = arith.mulf %28, %40 : vector<16x1024xf32>
      %42 = arith.truncf %41 : vector<16x1024xf32> to vector<16x1024xbf16>
      %cst_22 = arith.constant dense<0.000000e+00> : vector<40x1024xf32>
      %43 = tpu.matmul %0, %42, %cst_22 {dimension_numbers = #tpu.dot_dimension_numbers<[1], [0], [0], [1], [0, 0, 1, 1], [], []>} : vector<40x16xbf16>, vector<16x1024xbf16>, vector<40x1024xf32> -> vector<40x1024xf32>
      %44 = arith.addf %43, %6 : vector<40x1024xf32>
      %45 = vector.extract_strided_slice %44 {offsets = [0, 0], sizes = [16, 1024], strides = [1, 1]} : vector<40x1024xf32> to vector<16x1024xf32>
      %46 = vector.extract_strided_slice %44 {offsets = [16, 0], sizes = [16, 1024], strides = [1, 1]} : vector<40x1024xf32> to vector<16x1024xf32>
      %cst_23 = arith.constant 0.000000e+00 : f32
      %47 = vector.broadcast %cst_23 : f32 to vector<16x1024xf32>
      %48 = arith.maximumf %46, %47 : vector<16x1024xf32>
      %49 = vector.extract_strided_slice %44 {offsets = [32, 0], sizes = [1, 1024], strides = [1, 1]} : vector<40x1024xf32> to vector<1x1024xf32>
      %50 = vector.extract_strided_slice %49 {offsets = [0, 0], sizes = [1, 128], strides = [1, 1]} : vector<1x1024xf32> to vector<1x128xf32>
      %51 = vector.shape_cast %50 : vector<1x128xf32> to vector<1x1x128xf32>
      %cst_24 = arith.constant dense<0xFF800000> : vector<1xf32>
      %52 = vector.multi_reduction <maximumf>, %51, %cst_24 [1, 2] : vector<1x1x128xf32> to vector<1xf32>
      %53 = vector.shape_cast %52 : vector<1xf32> to vector<1x1x1xf32>
      %54 = vector.extract %53[0, 0, 0] : f32 from vector<1x1x1xf32>
      %55 = vector.broadcast %54 : f32 to vector<1x1xf32>
      %56 = vector.broadcast %55 : vector<1x1xf32> to vector<1x128xf32>
      %57 = arith.subf %50, %56 : vector<1x128xf32>
      %58 = math.exp %57 : vector<1x128xf32>
      %59 = vector.shape_cast %58 : vector<1x128xf32> to vector<1x1x128xf32>
      %cst_25 = arith.constant dense<0.000000e+00> : vector<1xf32>
      %60 = vector.multi_reduction <add>, %59, %cst_25 [1, 2] : vector<1x1x128xf32> to vector<1xf32>
      %61 = vector.shape_cast %60 : vector<1xf32> to vector<1x1x1xf32>
      %62 = vector.extract %61[0, 0, 0] : f32 from vector<1x1x1xf32>
      %63 = vector.broadcast %62 : f32 to vector<1x1xf32>
      %64 = vector.extract_strided_slice %45 {offsets = [0, 0], sizes = [16, 128], strides = [1, 1]} : vector<16x1024xf32> to vector<16x128xf32>
      %65 = vector.broadcast %58 : vector<1x128xf32> to vector<16x128xf32>
      %66 = arith.mulf %64, %65 : vector<16x128xf32>
      %cst_26 = arith.constant dense<0.000000e+00> : vector<16xf32>
      %67 = vector.multi_reduction <add>, %66, %cst_26 [1] : vector<16x128xf32> to vector<16xf32>
      %68 = vector.shape_cast %67 : vector<16xf32> to vector<16x1xf32>
      %69 = vector.extract_strided_slice %48 {offsets = [0, 0], sizes = [16, 128], strides = [1, 1]} : vector<16x1024xf32> to vector<16x128xf32>
      %70 = vector.broadcast %63 : vector<1x1xf32> to vector<16x1xf32>
      %71 = arith.divf %68, %70 : vector<16x1xf32>
      %72 = vector.broadcast %71 : vector<16x1xf32> to vector<16x128xf32>
      %73 = arith.mulf %69, %72 : vector<16x128xf32>
      %74 = vector.extract_strided_slice %49 {offsets = [0, 128], sizes = [1, 128], strides = [1, 1]} : vector<1x1024xf32> to vector<1x128xf32>
      %75 = vector.shape_cast %74 : vector<1x128xf32> to vector<1x1x128xf32>
      %cst_27 = arith.constant dense<0xFF800000> : vector<1xf32>
      %76 = vector.multi_reduction <maximumf>, %75, %cst_27 [1, 2] : vector<1x1x128xf32> to vector<1xf32>
      %77 = vector.shape_cast %76 : vector<1xf32> to vector<1x1x1xf32>
      %78 = vector.extract %77[0, 0, 0] : f32 from vector<1x1x1xf32>
      %79 = vector.broadcast %78 : f32 to vector<1x1xf32>
      %80 = vector.broadcast %79 : vector<1x1xf32> to vector<1x128xf32>
      %81 = arith.subf %74, %80 : vector<1x128xf32>
      %82 = math.exp %81 : vector<1x128xf32>
      %83 = vector.shape_cast %82 : vector<1x128xf32> to vector<1x1x128xf32>
      %cst_28 = arith.constant dense<0.000000e+00> : vector<1xf32>
      %84 = vector.multi_reduction <add>, %83, %cst_28 [1, 2] : vector<1x1x128xf32> to vector<1xf32>
      %85 = vector.shape_cast %84 : vector<1xf32> to vector<1x1x1xf32>
      %86 = vector.extract %85[0, 0, 0] : f32 from vector<1x1x1xf32>
      %87 = vector.broadcast %86 : f32 to vector<1x1xf32>
      %88 = vector.extract_strided_slice %45 {offsets = [0, 128], sizes = [16, 128], strides = [1, 1]} : vector<16x1024xf32> to vector<16x128xf32>
      %89 = vector.broadcast %82 : vector<1x128xf32> to vector<16x128xf32>
      %90 = arith.mulf %88, %89 : vector<16x128xf32>
      %cst_29 = arith.constant dense<0.000000e+00> : vector<16xf32>
      %91 = vector.multi_reduction <add>, %90, %cst_29 [1] : vector<16x128xf32> to vector<16xf32>
      %92 = vector.shape_cast %91 : vector<16xf32> to vector<16x1xf32>
      %93 = vector.extract_strided_slice %48 {offsets = [0, 128], sizes = [16, 128], strides = [1, 1]} : vector<16x1024xf32> to vector<16x128xf32>
      %94 = vector.broadcast %87 : vector<1x1xf32> to vector<16x1xf32>
      %95 = arith.divf %92, %94 : vector<16x1xf32>
      %96 = vector.broadcast %95 : vector<16x1xf32> to vector<16x128xf32>
      %97 = arith.mulf %93, %96 : vector<16x128xf32>
      %98 = vector.extract_strided_slice %49 {offsets = [0, 256], sizes = [1, 128], strides = [1, 1]} : vector<1x1024xf32> to vector<1x128xf32>
      %99 = vector.shape_cast %98 : vector<1x128xf32> to vector<1x1x128xf32>
      %cst_30 = arith.constant dense<0xFF800000> : vector<1xf32>
      %100 = vector.multi_reduction <maximumf>, %99, %cst_30 [1, 2] : vector<1x1x128xf32> to vector<1xf32>
      %101 = vector.shape_cast %100 : vector<1xf32> to vector<1x1x1xf32>
      %102 = vector.extract %101[0, 0, 0] : f32 from vector<1x1x1xf32>
      %103 = vector.broadcast %102 : f32 to vector<1x1xf32>
      %104 = vector.broadcast %103 : vector<1x1xf32> to vector<1x128xf32>
      %105 = arith.subf %98, %104 : vector<1x128xf32>
      %106 = math.exp %105 : vector<1x128xf32>
      %107 = vector.shape_cast %106 : vector<1x128xf32> to vector<1x1x128xf32>
      %cst_31 = arith.constant dense<0.000000e+00> : vector<1xf32>
      %108 = vector.multi_reduction <add>, %107, %cst_31 [1, 2] : vector<1x1x128xf32> to vector<1xf32>
      %109 = vector.shape_cast %108 : vector<1xf32> to vector<1x1x1xf32>
      %110 = vector.extract %109[0, 0, 0] : f32 from vector<1x1x1xf32>
      %111 = vector.broadcast %110 : f32 to vector<1x1xf32>
      %112 = vector.extract_strided_slice %45 {offsets = [0, 256], sizes = [16, 128], strides = [1, 1]} : vector<16x1024xf32> to vector<16x128xf32>
      %113 = vector.broadcast %106 : vector<1x128xf32> to vector<16x128xf32>
      %114 = arith.mulf %112, %113 : vector<16x128xf32>
      %cst_32 = arith.constant dense<0.000000e+00> : vector<16xf32>
      %115 = vector.multi_reduction <add>, %114, %cst_32 [1] : vector<16x128xf32> to vector<16xf32>
      %116 = vector.shape_cast %115 : vector<16xf32> to vector<16x1xf32>
      %117 = vector.extract_strided_slice %48 {offsets = [0, 256], sizes = [16, 128], strides = [1, 1]} : vector<16x1024xf32> to vector<16x128xf32>
      %118 = vector.broadcast %111 : vector<1x1xf32> to vector<16x1xf32>
      %119 = arith.divf %116, %118 : vector<16x1xf32>
      %120 = vector.broadcast %119 : vector<16x1xf32> to vector<16x128xf32>
      %121 = arith.mulf %117, %120 : vector<16x128xf32>
      %122 = vector.extract_strided_slice %49 {offsets = [0, 384], sizes = [1, 128], strides = [1, 1]} : vector<1x1024xf32> to vector<1x128xf32>
      %123 = vector.shape_cast %122 : vector<1x128xf32> to vector<1x1x128xf32>
      %cst_33 = arith.constant dense<0xFF800000> : vector<1xf32>
      %124 = vector.multi_reduction <maximumf>, %123, %cst_33 [1, 2] : vector<1x1x128xf32> to vector<1xf32>
      %125 = vector.shape_cast %124 : vector<1xf32> to vector<1x1x1xf32>
      %126 = vector.extract %125[0, 0, 0] : f32 from vector<1x1x1xf32>
      %127 = vector.broadcast %126 : f32 to vector<1x1xf32>
      %128 = vector.broadcast %127 : vector<1x1xf32> to vector<1x128xf32>
      %129 = arith.subf %122, %128 : vector<1x128xf32>
      %130 = math.exp %129 : vector<1x128xf32>
      %131 = vector.shape_cast %130 : vector<1x128xf32> to vector<1x1x128xf32>
      %cst_34 = arith.constant dense<0.000000e+00> : vector<1xf32>
      %132 = vector.multi_reduction <add>, %131, %cst_34 [1, 2] : vector<1x1x128xf32> to vector<1xf32>
      %133 = vector.shape_cast %132 : vector<1xf32> to vector<1x1x1xf32>
      %134 = vector.extract %133[0, 0, 0] : f32 from vector<1x1x1xf32>
      %135 = vector.broadcast %134 : f32 to vector<1x1xf32>
      %136 = vector.extract_strided_slice %45 {offsets = [0, 384], sizes = [16, 128], strides = [1, 1]} : vector<16x1024xf32> to vector<16x128xf32>
      %137 = vector.broadcast %130 : vector<1x128xf32> to vector<16x128xf32>
      %138 = arith.mulf %136, %137 : vector<16x128xf32>
      %cst_35 = arith.constant dense<0.000000e+00> : vector<16xf32>
      %139 = vector.multi_reduction <add>, %138, %cst_35 [1] : vector<16x128xf32> to vector<16xf32>
      %140 = vector.shape_cast %139 : vector<16xf32> to vector<16x1xf32>
      %141 = vector.extract_strided_slice %48 {offsets = [0, 384], sizes = [16, 128], strides = [1, 1]} : vector<16x1024xf32> to vector<16x128xf32>
      %142 = vector.broadcast %135 : vector<1x1xf32> to vector<16x1xf32>
      %143 = arith.divf %140, %142 : vector<16x1xf32>
      %144 = vector.broadcast %143 : vector<16x1xf32> to vector<16x128xf32>
      %145 = arith.mulf %141, %144 : vector<16x128xf32>
      %146 = vector.extract_strided_slice %49 {offsets = [0, 512], sizes = [1, 128], strides = [1, 1]} : vector<1x1024xf32> to vector<1x128xf32>
      %147 = vector.shape_cast %146 : vector<1x128xf32> to vector<1x1x128xf32>
      %cst_36 = arith.constant dense<0xFF800000> : vector<1xf32>
      %148 = vector.multi_reduction <maximumf>, %147, %cst_36 [1, 2] : vector<1x1x128xf32> to vector<1xf32>
      %149 = vector.shape_cast %148 : vector<1xf32> to vector<1x1x1xf32>
      %150 = vector.extract %149[0, 0, 0] : f32 from vector<1x1x1xf32>
      %151 = vector.broadcast %150 : f32 to vector<1x1xf32>
      %152 = vector.broadcast %151 : vector<1x1xf32> to vector<1x128xf32>
      %153 = arith.subf %146, %152 : vector<1x128xf32>
      %154 = math.exp %153 : vector<1x128xf32>
      %155 = vector.shape_cast %154 : vector<1x128xf32> to vector<1x1x128xf32>
      %cst_37 = arith.constant dense<0.000000e+00> : vector<1xf32>
      %156 = vector.multi_reduction <add>, %155, %cst_37 [1, 2] : vector<1x1x128xf32> to vector<1xf32>
      %157 = vector.shape_cast %156 : vector<1xf32> to vector<1x1x1xf32>
      %158 = vector.extract %157[0, 0, 0] : f32 from vector<1x1x1xf32>
      %159 = vector.broadcast %158 : f32 to vector<1x1xf32>
      %160 = vector.extract_strided_slice %45 {offsets = [0, 512], sizes = [16, 128], strides = [1, 1]} : vector<16x1024xf32> to vector<16x128xf32>
      %161 = vector.broadcast %154 : vector<1x128xf32> to vector<16x128xf32>
      %162 = arith.mulf %160, %161 : vector<16x128xf32>
      %cst_38 = arith.constant dense<0.000000e+00> : vector<16xf32>
      %163 = vector.multi_reduction <add>, %162, %cst_38 [1] : vector<16x128xf32> to vector<16xf32>
      %164 = vector.shape_cast %163 : vector<16xf32> to vector<16x1xf32>
      %165 = vector.extract_strided_slice %48 {offsets = [0, 512], sizes = [16, 128], strides = [1, 1]} : vector<16x1024xf32> to vector<16x128xf32>
      %166 = vector.broadcast %159 : vector<1x1xf32> to vector<16x1xf32>
      %167 = arith.divf %164, %166 : vector<16x1xf32>
      %168 = vector.broadcast %167 : vector<16x1xf32> to vector<16x128xf32>
      %169 = arith.mulf %165, %168 : vector<16x128xf32>
      %170 = vector.extract_strided_slice %49 {offsets = [0, 640], sizes = [1, 128], strides = [1, 1]} : vector<1x1024xf32> to vector<1x128xf32>
      %171 = vector.shape_cast %170 : vector<1x128xf32> to vector<1x1x128xf32>
      %cst_39 = arith.constant dense<0xFF800000> : vector<1xf32>
      %172 = vector.multi_reduction <maximumf>, %171, %cst_39 [1, 2] : vector<1x1x128xf32> to vector<1xf32>
      %173 = vector.shape_cast %172 : vector<1xf32> to vector<1x1x1xf32>
      %174 = vector.extract %173[0, 0, 0] : f32 from vector<1x1x1xf32>
      %175 = vector.broadcast %174 : f32 to vector<1x1xf32>
      %176 = vector.broadcast %175 : vector<1x1xf32> to vector<1x128xf32>
      %177 = arith.subf %170, %176 : vector<1x128xf32>
      %178 = math.exp %177 : vector<1x128xf32>
      %179 = vector.shape_cast %178 : vector<1x128xf32> to vector<1x1x128xf32>
      %cst_40 = arith.constant dense<0.000000e+00> : vector<1xf32>
      %180 = vector.multi_reduction <add>, %179, %cst_40 [1, 2] : vector<1x1x128xf32> to vector<1xf32>
      %181 = vector.shape_cast %180 : vector<1xf32> to vector<1x1x1xf32>
      %182 = vector.extract %181[0, 0, 0] : f32 from vector<1x1x1xf32>
      %183 = vector.broadcast %182 : f32 to vector<1x1xf32>
      %184 = vector.extract_strided_slice %45 {offsets = [0, 640], sizes = [16, 128], strides = [1, 1]} : vector<16x1024xf32> to vector<16x128xf32>
      %185 = vector.broadcast %178 : vector<1x128xf32> to vector<16x128xf32>
      %186 = arith.mulf %184, %185 : vector<16x128xf32>
      %cst_41 = arith.constant dense<0.000000e+00> : vector<16xf32>
      %187 = vector.multi_reduction <add>, %186, %cst_41 [1] : vector<16x128xf32> to vector<16xf32>
      %188 = vector.shape_cast %187 : vector<16xf32> to vector<16x1xf32>
      %189 = vector.extract_strided_slice %48 {offsets = [0, 640], sizes = [16, 128], strides = [1, 1]} : vector<16x1024xf32> to vector<16x128xf32>
      %190 = vector.broadcast %183 : vector<1x1xf32> to vector<16x1xf32>
      %191 = arith.divf %188, %190 : vector<16x1xf32>
      %192 = vector.broadcast %191 : vector<16x1xf32> to vector<16x128xf32>
      %193 = arith.mulf %189, %192 : vector<16x128xf32>
      %194 = vector.extract_strided_slice %49 {offsets = [0, 768], sizes = [1, 128], strides = [1, 1]} : vector<1x1024xf32> to vector<1x128xf32>
      %195 = vector.shape_cast %194 : vector<1x128xf32> to vector<1x1x128xf32>
      %cst_42 = arith.constant dense<0xFF800000> : vector<1xf32>
      %196 = vector.multi_reduction <maximumf>, %195, %cst_42 [1, 2] : vector<1x1x128xf32> to vector<1xf32>
      %197 = vector.shape_cast %196 : vector<1xf32> to vector<1x1x1xf32>
      %198 = vector.extract %197[0, 0, 0] : f32 from vector<1x1x1xf32>
      %199 = vector.broadcast %198 : f32 to vector<1x1xf32>
      %200 = vector.broadcast %199 : vector<1x1xf32> to vector<1x128xf32>
      %201 = arith.subf %194, %200 : vector<1x128xf32>
      %202 = math.exp %201 : vector<1x128xf32>
      %203 = vector.shape_cast %202 : vector<1x128xf32> to vector<1x1x128xf32>
      %cst_43 = arith.constant dense<0.000000e+00> : vector<1xf32>
      %204 = vector.multi_reduction <add>, %203, %cst_43 [1, 2] : vector<1x1x128xf32> to vector<1xf32>
      %205 = vector.shape_cast %204 : vector<1xf32> to vector<1x1x1xf32>
      %206 = vector.extract %205[0, 0, 0] : f32 from vector<1x1x1xf32>
      %207 = vector.broadcast %206 : f32 to vector<1x1xf32>
      %208 = vector.extract_strided_slice %45 {offsets = [0, 768], sizes = [16, 128], strides = [1, 1]} : vector<16x1024xf32> to vector<16x128xf32>
      %209 = vector.broadcast %202 : vector<1x128xf32> to vector<16x128xf32>
      %210 = arith.mulf %208, %209 : vector<16x128xf32>
      %cst_44 = arith.constant dense<0.000000e+00> : vector<16xf32>
      %211 = vector.multi_reduction <add>, %210, %cst_44 [1] : vector<16x128xf32> to vector<16xf32>
      %212 = vector.shape_cast %211 : vector<16xf32> to vector<16x1xf32>
      %213 = vector.extract_strided_slice %48 {offsets = [0, 768], sizes = [16, 128], strides = [1, 1]} : vector<16x1024xf32> to vector<16x128xf32>
      %214 = vector.broadcast %207 : vector<1x1xf32> to vector<16x1xf32>
      %215 = arith.divf %212, %214 : vector<16x1xf32>
      %216 = vector.broadcast %215 : vector<16x1xf32> to vector<16x128xf32>
      %217 = arith.mulf %213, %216 : vector<16x128xf32>
      %218 = vector.extract_strided_slice %49 {offsets = [0, 896], sizes = [1, 128], strides = [1, 1]} : vector<1x1024xf32> to vector<1x128xf32>
      %219 = vector.shape_cast %218 : vector<1x128xf32> to vector<1x1x128xf32>
      %cst_45 = arith.constant dense<0xFF800000> : vector<1xf32>
      %220 = vector.multi_reduction <maximumf>, %219, %cst_45 [1, 2] : vector<1x1x128xf32> to vector<1xf32>
      %221 = vector.shape_cast %220 : vector<1xf32> to vector<1x1x1xf32>
      %222 = vector.extract %221[0, 0, 0] : f32 from vector<1x1x1xf32>
      %223 = vector.broadcast %222 : f32 to vector<1x1xf32>
      %224 = vector.broadcast %223 : vector<1x1xf32> to vector<1x128xf32>
      %225 = arith.subf %218, %224 : vector<1x128xf32>
      %226 = math.exp %225 : vector<1x128xf32>
      %227 = vector.shape_cast %226 : vector<1x128xf32> to vector<1x1x128xf32>
      %cst_46 = arith.constant dense<0.000000e+00> : vector<1xf32>
      %228 = vector.multi_reduction <add>, %227, %cst_46 [1, 2] : vector<1x1x128xf32> to vector<1xf32>
      %229 = vector.shape_cast %228 : vector<1xf32> to vector<1x1x1xf32>
      %230 = vector.extract %229[0, 0, 0] : f32 from vector<1x1x1xf32>
      %231 = vector.broadcast %230 : f32 to vector<1x1xf32>
      %232 = vector.extract_strided_slice %45 {offsets = [0, 896], sizes = [16, 128], strides = [1, 1]} : vector<16x1024xf32> to vector<16x128xf32>
      %233 = vector.broadcast %226 : vector<1x128xf32> to vector<16x128xf32>
      %234 = arith.mulf %232, %233 : vector<16x128xf32>
      %cst_47 = arith.constant dense<0.000000e+00> : vector<16xf32>
      %235 = vector.multi_reduction <add>, %234, %cst_47 [1] : vector<16x128xf32> to vector<16xf32>
      %236 = vector.shape_cast %235 : vector<16xf32> to vector<16x1xf32>
      %237 = vector.extract_strided_slice %48 {offsets = [0, 896], sizes = [16, 128], strides = [1, 1]} : vector<16x1024xf32> to vector<16x128xf32>
      %238 = vector.broadcast %231 : vector<1x1xf32> to vector<16x1xf32>
      %239 = arith.divf %236, %238 : vector<16x1xf32>
      %240 = vector.broadcast %239 : vector<16x1xf32> to vector<16x128xf32>
      %241 = arith.mulf %237, %240 : vector<16x128xf32>
      %242 = tpu.concatenate %73, %97, %121, %145, %169, %193, %217, %241 in 1 : vector<16x128xf32>, vector<16x128xf32>, vector<16x128xf32>, vector<16x128xf32>, vector<16x128xf32>, vector<16x128xf32>, vector<16x128xf32>, vector<16x128xf32> -> vector<16x1024xf32>
      %243 = arith.truncf %242 : vector<16x1024xf32> to vector<16x1024xbf16>
      %cst_48 = arith.constant dense<0.000000e+00> : vector<16x1024xf32>
      %244 = tpu.matmul %1, %243, %cst_48 {dimension_numbers = #tpu.dot_dimension_numbers<[1], [0], [0], [1], [0, 0, 1, 1], [], []>} : vector<16x16xbf16>, vector<16x1024xbf16>, vector<16x1024xf32> -> vector<16x1024xf32>
      %245 = arith.addf %244, %9 : vector<16x1024xf32>
      %246 = arith.addf %19, %245 : vector<16x1024xf32>
      %247 = vector.shape_cast %246 : vector<16x1024xf32> to vector<1x16x1024xf32>
      %cst_49 = arith.constant dense<0.000000e+00> : vector<1xf32>
      %248 = vector.multi_reduction <add>, %247, %cst_49 [1, 2] : vector<1x16x1024xf32> to vector<1xf32>
      %249 = vector.shape_cast %248 : vector<1xf32> to vector<1x1x1xf32>
      %250 = vector.extract %249[0, 0, 0] : f32 from vector<1x1x1xf32>
      %251 = vector.broadcast %250 : f32 to vector<1x1xf32>
      %cst_50 = arith.constant 6.10351563E-5 : f32
      %252 = vector.broadcast %cst_50 : f32 to vector<1x1xf32>
      %253 = arith.mulf %251, %252 : vector<1x1xf32>
      %254 = vector.broadcast %253 : vector<1x1xf32> to vector<16x1024xf32>
      %255 = arith.subf %246, %254 : vector<16x1024xf32>
      %256 = arith.mulf %255, %255 : vector<16x1024xf32>
      %257 = vector.shape_cast %256 : vector<16x1024xf32> to vector<1x16x1024xf32>
      %cst_51 = arith.constant dense<0.000000e+00> : vector<1xf32>
      %258 = vector.multi_reduction <add>, %257, %cst_51 [1, 2] : vector<1x16x1024xf32> to vector<1xf32>
      %259 = vector.shape_cast %258 : vector<1xf32> to vector<1x1x1xf32>
      %260 = vector.extract %259[0, 0, 0] : f32 from vector<1x1x1xf32>
      %261 = vector.broadcast %260 : f32 to vector<1x1xf32>
      %cst_52 = arith.constant 6.10351563E-5 : f32
      %262 = vector.broadcast %cst_52 : f32 to vector<1x1xf32>
      %263 = arith.mulf %261, %262 : vector<1x1xf32>
      %cst_53 = arith.constant 9.99999974E-6 : f32
      %264 = vector.broadcast %cst_53 : f32 to vector<1x1xf32>
      %265 = arith.addf %263, %264 : vector<1x1xf32>
      %266 = math.rsqrt %265 : vector<1x1xf32>
      %267 = vector.broadcast %266 : vector<1x1xf32> to vector<16x1024xf32>
      %268 = arith.mulf %255, %267 : vector<16x1024xf32>
      %269 = arith.truncf %268 : vector<16x1024xf32> to vector<16x1024xbf16>
      %cst_54 = arith.constant dense<0.000000e+00> : vector<32x1024xf32>
      %270 = tpu.matmul %2, %269, %cst_54 {dimension_numbers = #tpu.dot_dimension_numbers<[1], [0], [0], [1], [0, 0, 1, 1], [], []>} : vector<32x16xbf16>, vector<16x1024xbf16>, vector<32x1024xf32> -> vector<32x1024xf32>
      %271 = arith.addf %270, %12 : vector<32x1024xf32>
      %272 = arith.negf %271 : vector<32x1024xf32>
      %273 = math.exp %272 : vector<32x1024xf32>
      %cst_55 = arith.constant 1.000000e+00 : f32
      %274 = vector.broadcast %cst_55 : f32 to vector<32x1024xf32>
      %275 = arith.addf %274, %273 : vector<32x1024xf32>
      %276 = arith.divf %274, %275 : vector<32x1024xf32>
      %277 = arith.mulf %271, %276 : vector<32x1024xf32>
      %278 = arith.truncf %277 : vector<32x1024xf32> to vector<32x1024xbf16>
      %cst_56 = arith.constant dense<0.000000e+00> : vector<16x1024xf32>
      %279 = tpu.matmul %3, %278, %cst_56 {dimension_numbers = #tpu.dot_dimension_numbers<[1], [0], [0], [1], [0, 0, 1, 1], [], []>} : vector<16x32xbf16>, vector<32x1024xbf16>, vector<16x1024xf32> -> vector<16x1024xf32>
      %280 = arith.addf %279, %15 : vector<16x1024xf32>
      %281 = arith.addf %246, %280 : vector<16x1024xf32>
      %282 = arith.index_cast %arg11 : i32 to index
      %c0_57 = arith.constant 0 : index
      %c0_58 = arith.constant 0 : index
      %283 = vector.load %arg10[%282, %c0_57, %c0_58] : memref<4x16x1024xf32, #tpu.memory_space<vmem>>, vector<1x16x1024xf32>
      %284 = vector.shape_cast %283 : vector<1x16x1024xf32> to vector<16x1024xf32>
      %285 = vector.shape_cast %281 : vector<16x1024xf32> to vector<1x16x1024xf32>
      tpu.vector_store %arg10[%282, %c0_57, %c0_58], %285 {strides = array<i32>} : memref<4x16x1024xf32, #tpu.memory_space<vmem>>, vector<1x16x1024xf32>,
    }
    %c4_i32_15 = arith.constant 4 : i32
    return
  }
  func.func @transform_0(%arg0: i32) -> (i32, i32, i32) {
    %c0_i32 = arith.constant 0 : i32
    %c0_i32_0 = arith.constant 0 : i32
    %c0_i32_1 = arith.constant 0 : i32
    return %arg0, %c0_i32, %c0_i32_0 : i32, i32, i32
  }
  func.func @transform_1(%arg0: i32) -> (i32, i32) {
    %c0_i32 = arith.constant 0 : i32
    %c0_i32_0 = arith.constant 0 : i32
    %c0_i32_1 = arith.constant 0 : i32
    return %c0_i32, %c0_i32_0 : i32, i32
  }
  func.func @transform_2(%arg0: i32) -> (i32, i32) {
    %c0_i32 = arith.constant 0 : i32
    %c0_i32_0 = arith.constant 0 : i32
    %c0_i32_1 = arith.constant 0 : i32
    return %c0_i32, %c0_i32_0 : i32, i32
  }
  func.func @transform_3(%arg0: i32) -> (i32, i32) {
    %c0_i32 = arith.constant 0 : i32
    %c0_i32_0 = arith.constant 0 : i32
    %c0_i32_1 = arith.constant 0 : i32
    return %c0_i32, %c0_i32_0 : i32, i32
  }
  func.func @transform_4(%arg0: i32) -> (i32, i32) {
    %c0_i32 = arith.constant 0 : i32
    %c0_i32_0 = arith.constant 0 : i32
    %c0_i32_1 = arith.constant 0 : i32
    return %c0_i32, %c0_i32_0 : i32, i32
  }
  func.func @transform_5(%arg0: i32) -> (i32, i32) {
    %c0_i32 = arith.constant 0 : i32
    %c0_i32_0 = arith.constant 0 : i32
    %c0_i32_1 = arith.constant 0 : i32
    return %c0_i32, %c0_i32_0 : i32, i32
  }
  func.func @transform_6(%arg0: i32) -> (i32, i32) {
    %c0_i32 = arith.constant 0 : i32
    %c0_i32_0 = arith.constant 0 : i32
    %c0_i32_1 = arith.constant 0 : i32
    return %c0_i32, %c0_i32_0 : i32, i32
  }
  func.func @transform_7(%arg0: i32) -> (i32, i32) {
    %c0_i32 = arith.constant 0 : i32
    %c0_i32_0 = arith.constant 0 : i32
    %c0_i32_1 = arith.constant 0 : i32
    return %c0_i32, %c0_i32_0 : i32, i32
  }
  func.func @transform_8(%arg0: i32) -> (i32, i32) {
    %c0_i32 = arith.constant 0 : i32
    %c0_i32_0 = arith.constant 0 : i32
    %c0_i32_1 = arith.constant 0 : i32
    return %c0_i32, %c0_i32_0 : i32, i32
  }
  func.func @transform_9(%arg0: i32) -> (i32, i32, i32) {
    %c0_i32 = arith.constant 0 : i32
    %c0_i32_0 = arith.constant 0 : i32
    %c0_i32_1 = arith.constant 0 : i32
    return %arg0, %c0_i32, %c0_i32_0 : i32, i32, i32
  }
}

</mosaic_0001>

<llo_original>
// kernel: tpu_custom_call.1
$region0: #{tpu_custom_call.1}
  #allocation0 [shape = 'u32[]', space=smem, size = 0x4, offset = 0x4, fixed_abs, tag = 'smem constant byte address 0x4 - core index']
  #allocation1 [shape = 'u32[72,128]{1,0:T(1,128)}', space=vmem, size = 0x9000, scoped, tag = 'internal scratch']
  %s0 = inlined_call_operand.hbm [shape: f32[16,16,1024], index: 0, kind: input, shape index: {}]
  %s1 = inlined_call_operand.vmem [shape: bf16[40,16], index: 1, kind: input, shape index: {}]
  %s2 = inlined_call_operand.vmem [shape: f32[40,1], index: 2, kind: input, shape index: {}]
  %s3 = inlined_call_operand.vmem [shape: bf16[16,16], index: 3, kind: input, shape index: {}]
  %s4 = inlined_call_operand.vmem [shape: f32[16,1], index: 4, kind: input, shape index: {}]
  %s5 = inlined_call_operand.vmem [shape: bf16[32,16], index: 5, kind: input, shape index: {}]
  %s6 = inlined_call_operand.vmem [shape: f32[32,1], index: 6, kind: input, shape index: {}]
  %s7 = inlined_call_operand.vmem [shape: bf16[16,32], index: 7, kind: input, shape index: {}]
  %s8 = inlined_call_operand.vmem [shape: f32[16,1], index: 8, kind: input, shape index: {}]
  %s9 = inlined_call_operand.hbm [shape: f32[16,16,1024], index: 9, kind: output, shape index: {}]
  %s10 = sld [smem:[#allocation0]]
  $region80: #{tpu_custom_call.1} parent=0
    _
  %s12 = ssub.s32 1, %s10
  %s13 = scalar_select 0, %s12, %s10
  $region1: #{tpu_custom_call.1} parent=0
    #allocation2 [shape = 'u8[524288]{0}', space=vmem, size = 0x80000, scoped, tag = 'input window, operand 0']
    #allocation3 [shape = 's32[2]{0}', space=sflag, size = 0x8, scoped, tag = 'scoped memory for tpu_custom_call.1']
    #allocation4 [shape = 's32[2]{0}', space=sflag, size = 0x8, scoped, tag = 'scoped memory for tpu_custom_call.1']
    #allocation5 [shape = 'u8[524288]{0}', space=vmem, size = 0x80000, scoped, tag = 'output window, operand 0']
    %14 = vsyncpa [#allocation3], 0
    %s15 = scalar_lea.sflag [#allocation3], 1
    %16 = vsyncpa %s15, 0
    %17 = vsyncpa [#allocation4], 0
    %s18 = scalar_lea.sflag [#allocation4], 1
    %19 = vsyncpa %s18, 0
    loop: start=0, step=1, limit=6
    $region2: #{tpu_custom_call.1} parent=1 // loop_pre_header
      _
    $region3: #{tpu_custom_call.1} parent=1 // loop_header
      %s21 = sphi 0, %s25
      %p22 = scmp.ge.s32.totalorder %s21, 6
      %s31 = sphi 0, %s33
      %s34 = sphi 0, %s31
      %s35 = sphi 0, %s34
      %s51 = sphi 0, %s35
      %s55 = sphi 0, %s55
      %s57 = sphi 0, %s55
      %s58 = sphi 0, %s57
      %s72 = sphi 0, %s58
      %s76 = sphi 0, %s76
      %s78 = sphi 0, %s76
      %s79 = sphi 0, %s78
      %s93 = sphi 0, %s79
      %s97 = sphi 0, %s97
      %s99 = sphi 0, %s97
      %s100 = sphi 0, %s99
      %s114 = sphi 0, %s100
      %s118 = sphi 0, %s118
      %s120 = sphi 0, %s118
      %s121 = sphi 0, %s120
      %s135 = sphi 0, %s121
      %s139 = sphi 0, %s139
      %s141 = sphi 0, %s139
      %s142 = sphi 0, %s141
      %s156 = sphi 0, %s142
      %s160 = sphi 0, %s160
      %s162 = sphi 0, %s160
      %s163 = sphi 0, %s162
      %s177 = sphi 0, %s163
      %s181 = sphi 0, %s181
      %s183 = sphi 0, %s181
      %s184 = sphi 0, %s183
      %s198 = sphi 0, %s184
      %s202 = sphi 0, %s202
      %s204 = sphi 0, %s202
      %s205 = sphi 0, %s204
      %s219 = sphi 0, %s205
      %s225 = sphi 0, %s227
      %s228 = sphi 0, %s225
      %s229 = sphi 0, %s228
      %s245 = sphi 0, %s229
    $region4: #{tpu_custom_call.1} parent=1 // loop_header_branch
      %24 = sbr.rel (%p22) target = $region8
    $region5: #{tpu_custom_call.1} parent=1 // loop_body
      %s26 = ssub.s32 %s21, 1
      %s27 = ssub.s32 %s21, 2
      %s28 = sadd.s32 %s21, 1
      %s29 = ssub.s32 %s21, %s28
      %p30 = scmp.eq.s32.totalorder %s29, 0
      %s32 = sadd.s32 %s31, 1
      %s33 = scalar_select %p30, %s31, %s32
      %p36 = pneg %p30
      %p37 = scmp.eq.s32.totalorder %s21, 3
      %p38 = por %p36, %p37
      %p39 = scmp.ne.s32.totalorder %s31, %s34
      %p40 = scmp.eq.s32.totalorder %s21, 0
      %p41 = por %p39, %p40
      %p42 = scmp.ne.s32.totalorder %s31, %s34
      %p43 = scmp.eq.s32.totalorder %s26, 3
      %p44 = por %p42, %p43
      %p45 = scmp.ne.s32.totalorder %s34, %s35
      %p46 = scmp.eq.s32.totalorder %s26, 0
      %p47 = por %p45, %p46
      %p48 = scmp.ne.s32.totalorder %s34, %s35
      %p49 = scmp.eq.s32.totalorder %s27, 3
      %p50 = por %p48, %p49
      %p52 = scmp.ne.s32.totalorder %s35, %s51
      %p53 = scmp.eq.s32.totalorder %s27, 0
      %p54 = por %p52, %p53
      %s56 = sadd.s32 %s55, 1
      %p59 = scmp.eq.s32.totalorder %s21, 3
      %p60 = scmp.ne.s32.totalorder %s55, %s57
      %p61 = scmp.eq.s32.totalorder %s21, 0
      %p62 = por %p60, %p61
      %p63 = scmp.ne.s32.totalorder %s55, %s57
      %p64 = scmp.eq.s32.totalorder %s26, 3
      %p65 = por %p63, %p64
      %p66 = scmp.ne.s32.totalorder %s57, %s58
      %p67 = scmp.eq.s32.totalorder %s26, 0
      %p68 = por %p66, %p67
      %p69 = scmp.ne.s32.totalorder %s57, %s58
      %p70 = scmp.eq.s32.totalorder %s27, 3
      %p71 = por %p69, %p70
      %p73 = scmp.ne.s32.totalorder %s58, %s72
      %p74 = scmp.eq.s32.totalorder %s27, 0
      %p75 = por %p73, %p74
      %s77 = sadd.s32 %s76, 1
      %p80 = scmp.eq.s32.totalorder %s21, 3
      %p81 = scmp.ne.s32.totalorder %s76, %s78
      %p82 = scmp.eq.s32.totalorder %s21, 0
      %p83 = por %p81, %p82
      %p84 = scmp.ne.s32.totalorder %s76, %s78
      %p85 = scmp.eq.s32.totalorder %s26, 3
      %p86 = por %p84, %p85
      %p87 = scmp.ne.s32.totalorder %s78, %s79
      %p88 = scmp.eq.s32.totalorder %s26, 0
      %p89 = por %p87, %p88
      %p90 = scmp.ne.s32.totalorder %s78, %s79
      %p91 = scmp.eq.s32.totalorder %s27, 3
      %p92 = por %p90, %p91
      %p94 = scmp.ne.s32.totalorder %s79, %s93
      %p95 = scmp.eq.s32.totalorder %s27, 0
      %p96 = por %p94, %p95
      %s98 = sadd.s32 %s97, 1
      %p101 = scmp.eq.s32.totalorder %s21, 3
      %p102 = scmp.ne.s32.totalorder %s97, %s99
      %p103 = scmp.eq.s32.totalorder %s21, 0
      %p104 = por %p102, %p103
      %p105 = scmp.ne.s32.totalorder %s97, %s99
      %p106 = scmp.eq.s32.totalorder %s26, 3
      %p107 = por %p105, %p106
      %p108 = scmp.ne.s32.totalorder %s99, %s100
      %p109 = scmp.eq.s32.totalorder %s26, 0
      %p110 = por %p108, %p109
      %p111 = scmp.ne.s32.totalorder %s99, %s100
      %p112 = scmp.eq.s32.totalorder %s27, 3
      %p113 = por %p111, %p112
      %p115 = scmp.ne.s32.totalorder %s100, %s114
      %p116 = scmp.eq.s32.totalorder %s27, 0
      %p117 = por %p115, %p116
      %s119 = sadd.s32 %s118, 1
      %p122 = scmp.eq.s32.totalorder %s21, 3
      %p123 = scmp.ne.s32.totalorder %s118, %s120
      %p124 = scmp.eq.s32.totalorder %s21, 0
      %p125 = por %p123, %p124
      %p126 = scmp.ne.s32.totalorder %s118, %s120
      %p127 = scmp.eq.s32.totalorder %s26, 3
      %p128 = por %p126, %p127
      %p129 = scmp.ne.s32.totalorder %s120, %s121
      %p130 = scmp.eq.s32.totalorder %s26, 0
      %p131 = por %p129, %p130
      %p132 = scmp.ne.s32.totalorder %s120, %s121
      %p133 = scmp.eq.s32.totalorder %s27, 3
      %p134 = por %p132, %p133
      %p136 = scmp.ne.s32.totalorder %s121, %s135
      %p137 = scmp.eq.s32.totalorder %s27, 0
      %p138 = por %p136, %p137
      %s140 = sadd.s32 %s139, 1
      %p143 = scmp.eq.s32.totalorder %s21, 3
      %p144 = scmp.ne.s32.totalorder %s139, %s141
      %p145 = scmp.eq.s32.totalorder %s21, 0
      %p146 = por %p144, %p145
      %p147 = scmp.ne.s32.totalorder %s139, %s141
      %p148 = scmp.eq.s32.totalorder %s26, 3
      %p149 = por %p147, %p148
      %p150 = scmp.ne.s32.totalorder %s141, %s142
      %p151 = scmp.eq.s32.totalorder %s26, 0
      %p152 = por %p150, %p151
      %p153 = scmp.ne.s32.totalorder %s141, %s142
      %p154 = scmp.eq.s32.totalorder %s27, 3
      %p155 = por %p153, %p154
      %p157 = scmp.ne.s32.totalorder %s142, %s156
      %p158 = scmp.eq.s32.totalorder %s27, 0
      %p159 = por %p157, %p158
      %s161 = sadd.s32 %s160, 1
      %p164 = scmp.eq.s32.totalorder %s21, 3
      %p165 = scmp.ne.s32.totalorder %s160, %s162
      %p166 = scmp.eq.s32.totalorder %s21, 0
      %p167 = por %p165, %p166
      %p168 = scmp.ne.s32.totalorder %s160, %s162
      %p169 = scmp.eq.s32.totalorder %s26, 3
      %p170 = por %p168, %p169
      %p171 = scmp.ne.s32.totalorder %s162, %s163
      %p172 = scmp.eq.s32.totalorder %s26, 0
      %p173 = por %p171, %p172
      %p174 = scmp.ne.s32.totalorder %s162, %s163
      %p175 = scmp.eq.s32.totalorder %s27, 3
      %p176 = por %p174, %p175
      %p178 = scmp.ne.s32.totalorder %s163, %s177
      %p179 = scmp.eq.s32.totalorder %s27, 0
      %p180 = por %p178, %p179
      %s182 = sadd.s32 %s181, 1
      %p185 = scmp.eq.s32.totalorder %s21, 3
      %p186 = scmp.ne.s32.totalorder %s181, %s183
      %p187 = scmp.eq.s32.totalorder %s21, 0
      %p188 = por %p186, %p187
      %p189 = scmp.ne.s32.totalorder %s181, %s183
      %p190 = scmp.eq.s32.totalorder %s26, 3
      %p191 = por %p189, %p190
      %p192 = scmp.ne.s32.totalorder %s183, %s184
      %p193 = scmp.eq.s32.totalorder %s26, 0
      %p194 = por %p192, %p193
      %p195 = scmp.ne.s32.totalorder %s183, %s184
      %p196 = scmp.eq.s32.totalorder %s27, 3
      %p197 = por %p195, %p196
      %p199 = scmp.ne.s32.totalorder %s184, %s198
      %p200 = scmp.eq.s32.totalorder %s27, 0
      %p201 = por %p199, %p200
      %s203 = sadd.s32 %s202, 1
      %p206 = scmp.eq.s32.totalorder %s21, 3
      %p207 = scmp.ne.s32.totalorder %s202, %s204
      %p208 = scmp.eq.s32.totalorder %s21, 0
      %p209 = por %p207, %p208
      %p210 = scmp.ne.s32.totalorder %s202, %s204
      %p211 = scmp.eq.s32.totalorder %s26, 3
      %p212 = por %p210, %p211
      %p213 = scmp.ne.s32.totalorder %s204, %s205
      %p214 = scmp.eq.s32.totalorder %s26, 0
      %p215 = por %p213, %p214
      %p216 = scmp.ne.s32.totalorder %s204, %s205
      %p217 = scmp.eq.s32.totalorder %s27, 3
      %p218 = por %p216, %p217
      %p220 = scmp.ne.s32.totalorder %s205, %s219
      %p221 = scmp.eq.s32.totalorder %s27, 0
      %p222 = por %p220, %p221
      %s223 = ssub.s32 %s21, %s28
      %p224 = scmp.eq.s32.totalorder %s223, 0
      %s226 = sadd.s32 %s225, 1
      %s227 = scalar_select %p224, %s225, %s226
      %p230 = pneg %p224
      %p231 = scmp.eq.s32.totalorder %s21, 3
      %p232 = por %p230, %p231
      %p233 = scmp.ne.s32.totalorder %s225, %s228
      %p234 = scmp.eq.s32.totalorder %s21, 0
      %p235 = por %p233, %p234
      %p236 = scmp.ne.s32.totalorder %s225, %s228
      %p237 = scmp.eq.s32.totalorder %s26, 3
      %p238 = por %p236, %p237
      %p239 = scmp.ne.s32.totalorder %s228, %s229
      %p240 = scmp.eq.s32.totalorder %s26, 0
      %p241 = por %p239, %p240
      %p242 = scmp.ne.s32.totalorder %s228, %s229
      %p243 = scmp.eq.s32.totalorder %s27, 3
      %p244 = por %p242, %p243
      %p246 = scmp.ne.s32.totalorder %s229, %s245
      %p247 = scmp.eq.s32.totalorder %s27, 0
      %p248 = por %p246, %p247
      %p249 = scmp.le.s32.totalorder 1, %s21
      %p250 = scmp.lt.s32.totalorder %s21, 5
      %p251 = pnand %p249, %p250
      %p252 = pneg %p251
      // Predicated region
      $region9: #{tpu_custom_call.1} parent=5 // pred_check
        _
      $region10: #{tpu_custom_call.1} parent=5 // pred_check_branch
        %254 = sbr.rel (%p251) target = $region12
      $region11: #{tpu_custom_call.1} parent=5 // pred_region
        %s255 = ssub.s32 %s21, 1
        // Predicated region
        $region13: #{tpu_custom_call.1} parent=11 // pred_check
          %p256 = pneg %p68
        $region14: #{tpu_custom_call.1} parent=11 // pred_check_branch
          %258 = sbr.rel (%p256) target = $region16
        $region15: #{tpu_custom_call.1} parent=11 // pred_region
          _
        $region16: #{tpu_custom_call.1} parent=11 // pred_fallthru
          _
        // Predicated region
        $region17: #{tpu_custom_call.1} parent=11 // pred_check
          %p259 = pneg %p89
        $region18: #{tpu_custom_call.1} parent=11 // pred_check_branch
          %261 = sbr.rel (%p259) target = $region20
        $region19: #{tpu_custom_call.1} parent=11 // pred_region
          _
        $region20: #{tpu_custom_call.1} parent=11 // pred_fallthru
          _
        // Predicated region
        $region21: #{tpu_custom_call.1} parent=11 // pred_check
          %p262 = pneg %p110
        $region22: #{tpu_custom_call.1} parent=11 // pred_check_branch
          %264 = sbr.rel (%p262) target = $region24
        $region23: #{tpu_custom_call.1} parent=11 // pred_region
          _
        $region24: #{tpu_custom_call.1} parent=11 // pred_fallthru
          _
        // Predicated region
        $region25: #{tpu_custom_call.1} parent=11 // pred_check
          %p265 = pneg %p131
        $region26: #{tpu_custom_call.1} parent=11 // pred_check_branch
          %267 = sbr.rel (%p265) target = $region28
        $region27: #{tpu_custom_call.1} parent=11 // pred_region
          _
        $region28: #{tpu_custom_call.1} parent=11 // pred_fallthru
          _
        // Predicated region
        $region29: #{tpu_custom_call.1} parent=11 // pred_check
          %p268 = pneg %p152
        $region30: #{tpu_custom_call.1} parent=11 // pred_check_branch
          %270 = sbr.rel (%p268) target = $region32
        $region31: #{tpu_custom_call.1} parent=11 // pred_region
          _
        $region32: #{tpu_custom_call.1} parent=11 // pred_fallthru
          _
        // Predicated region
        $region33: #{tpu_custom_call.1} parent=11 // pred_check
          %p271 = pneg %p173
        $region34: #{tpu_custom_call.1} parent=11 // pred_check_branch
          %273 = sbr.rel (%p271) target = $region36
        $region35: #{tpu_custom_call.1} parent=11 // pred_region
          _
        $region36: #{tpu_custom_call.1} parent=11 // pred_fallthru
          _
        // Predicated region
        $region37: #{tpu_custom_call.1} parent=11 // pred_check
          %p274 = pneg %p194
        $region38: #{tpu_custom_call.1} parent=11 // pred_check_branch
          %276 = sbr.rel (%p274) target = $region40
        $region39: #{tpu_custom_call.1} parent=11 // pred_region
          _
        $region40: #{tpu_custom_call.1} parent=11 // pred_fallthru
          _
        // Predicated region
        $region41: #{tpu_custom_call.1} parent=11 // pred_check
          %p277 = pneg %p215
        $region42: #{tpu_custom_call.1} parent=11 // pred_check_branch
          %279 = sbr.rel (%p277) target = $region44
        $region43: #{tpu_custom_call.1} parent=11 // pred_region
          _
        $region44: #{tpu_custom_call.1} parent=11 // pred_fallthru
          _
      $region12: #{tpu_custom_call.1} parent=5 // pred_fallthru
        _
      %p280 = scmp.lt.s32.totalorder %s21, 4
      // Predicated region
      $region45: #{tpu_custom_call.1} parent=5 // pred_check
        %p281 = pneg %p280
      $region46: #{tpu_custom_call.1} parent=5 // pred_check_branch
        %283 = sbr.rel (%p281) target = $region48
      $region47: #{tpu_custom_call.1} parent=5 // pred_region
        // Predicated region
        $region49: #{tpu_custom_call.1} parent=47 // pred_check
          %p284 = pneg %p41
        $region50: #{tpu_custom_call.1} parent=47 // pred_check_branch
          %286 = sbr.rel (%p284) target = $region52
        $region51: #{tpu_custom_call.1} parent=47 // pred_region
          %s287 = sand.u32 %s31, 1
          %s288 = scalar_lea.sflag [#allocation3], %s287
          %s289 = sand.u32 %s31, 1
          %s290 = smul.addr %s289, 512
          %s291 = scalar_lea.vmem [#allocation2], %s290
          %s292 = smul.u32 4, %s21
          %294 = vsyncadd %s288, 0
          %s295 = smul.addr %s292, 16
          %s296 = smul.addr %s295, 8
          %s297 = scalar_lea.hbm %s0, %s296
          %s298 = sshll.u32 %s297, 4
          %s299 = int_to_ptr.hbm [resolvable:$true] %s298
          %s300 = sshll.u32 %s291, 4
          %s301 = int_to_ptr.vmem [resolvable:$true] %s300
          %306 = dma.hbm_to_vmem [thread:$0]  %s299, 8192, %s301, %s288, 1024, 1024, 64
        $region52: #{tpu_custom_call.1} parent=47 // pred_fallthru
          _
      $region48: #{tpu_custom_call.1} parent=5 // pred_fallthru
        _
      %p307 = scmp.le.s32.totalorder 1, %s21
      %p308 = scmp.lt.s32.totalorder %s21, 5
      %p309 = pnand %p307, %p308
      %p310 = pneg %p309
      // Predicated region
      $region53: #{tpu_custom_call.1} parent=5 // pred_check
        _
      $region54: #{tpu_custom_call.1} parent=5 // pred_check_branch
        %312 = sbr.rel (%p309) target = $region56
      $region55: #{tpu_custom_call.1} parent=5 // pred_region
        %s313 = ssub.s32 %s21, 1
        %s314 = sand.u32 %s34, 1
        %s315 = scalar_lea.sflag [#allocation3], %s314
        %s316 = sand.u32 %s34, 1
        %s317 = smul.addr %s316, 512
        %s318 = scalar_lea.vmem [#allocation2], %s317
        // Predicated region
        $region57: #{tpu_custom_call.1} parent=55 // pred_check
          %p319 = pneg %p47
        $region58: #{tpu_custom_call.1} parent=55 // pred_check_branch
          %321 = sbr.rel (%p319) target = $region60
        $region59: #{tpu_custom_call.1} parent=55 // pred_region
          %323 = dma.done %s315, 8192
        $region60: #{tpu_custom_call.1} parent=55 // pred_fallthru
          _
        %s324 = sand.u32 %s34, 1
        %s325 = scalar_lea.sflag [#allocation3], %s324
        %s326 = sand.u32 %s34, 1
        %s327 = smul.addr %s326, 512
        %s328 = scalar_lea.vmem [#allocation2], %s327
        %p329 = pneg %p47
        %p330 = pneg %p44
        %p331 = pneg %p68
        %p332 = pneg %p65
        %p333 = pneg %p89
        %p334 = pneg %p86
        %p335 = pneg %p110
        %p336 = pneg %p107
        %p337 = pneg %p131
        %p338 = pneg %p128
        %p339 = pneg %p152
        %p340 = pneg %p149
        %p341 = pneg %p173
        %p342 = pneg %p170
        %p343 = pneg %p194
        %p344 = pneg %p191
        %p345 = pneg %p215
        %p346 = pneg %p212
        %p347 = pneg %p241
        %p348 = pneg %p238
        %s349 = sand.u32 %s228, 1
        %s350 = scalar_lea.sflag [#allocation4], %s349
        %s351 = sand.u32 %s228, 1
        %s352 = smul.addr %s351, 512
        %s353 = scalar_lea.vmem [#allocation5], %s352
        %s354 = smul.u32 4, %s26
        %s355 = smul.u32 4, %s26
        %v357 = vld [vmem:[%s1] sm:$0xf]
        %v358 = vld [vmem:[%s1 + $0x4] sm:$0xf]
        %v359 = vld [vmem:[%s1 + $0x8] sm:$0xf]
        %v360 = vld [vmem:[%s1 + $0xc] sm:$0xf]
        %v361 = vld [vmem:[%s1 + $0x10] sm:$0xf]
        %v362 = vld [vmem:[%s3] sm:$0xf]
        %v363 = vld [vmem:[%s3 + $0x4] sm:$0xf]
        %v364 = vld [vmem:[%s5] sm:$0xf]
        %v365 = vld [vmem:[%s5 + $0x4] sm:$0xf]
        %v366 = vld [vmem:[%s5 + $0x8] sm:$0xf]
        %v367 = vld [vmem:[%s5 + $0xc] sm:$0xf]
        %v368 = vld [vmem:[%s7] sm:$0xf]
        %v369 = vld [vmem:[%s7 + $0x4] sm:$0xf]
        %v370 = vld [vmem:[%s2] sm:$0xff]
        %v371 = vld [vmem:[%s2 + $0x8] sm:$0xff]
        %v372 = vld [vmem:[%s2 + $0x10] sm:$0xff]
        %v373 = vld [vmem:[%s2 + $0x18] sm:$0xff]
        %v374 = vld [vmem:[%s2 + $0x20] sm:$0xff]
        %376 = vset.pattern.permute.xlu0 0
        %377 = vperm.xlu0 %376, %v370
        %v378 = vpop.permute.xlu0 %377
        %381 = vset.pattern.permute.xlu0 0
        %382 = vperm.xlu0 %381, %v371
        %v383 = vpop.permute.xlu0 %382
        %386 = vset.pattern.permute.xlu0 0
        %387 = vperm.xlu0 %386, %v372
        %v388 = vpop.permute.xlu0 %387
        %391 = vset.pattern.permute.xlu0 0
        %392 = vperm.xlu0 %391, %v373
        %v393 = vpop.permute.xlu0 %392
        %396 = vset.pattern.permute.xlu0 0
        %397 = vperm.xlu0 %396, %v374
        %v398 = vpop.permute.xlu0 %397
        %v400 = vld [vmem:[%s4] sm:$0xff]
        %v401 = vld [vmem:[%s4 + $0x8] sm:$0xff]
        %403 = vset.pattern.permute.xlu0 0
        %404 = vperm.xlu0 %403, %v400
        %v405 = vpop.permute.xlu0 %404
        %408 = vset.pattern.permute.xlu0 0
        %409 = vperm.xlu0 %408, %v401
        %v410 = vpop.permute.xlu0 %409
        %v412 = vld [vmem:[%s6] sm:$0xff]
        %v413 = vld [vmem:[%s6 + $0x8] sm:$0xff]
        %v414 = vld [vmem:[%s6 + $0x10] sm:$0xff]
        %v415 = vld [vmem:[%s6 + $0x18] sm:$0xff]
        %417 = vset.pattern.permute.xlu0 0
        %418 = vperm.xlu0 %417, %v412
        %v419 = vpop.permute.xlu0 %418
        %422 = vset.pattern.permute.xlu0 0
        %423 = vperm.xlu0 %422, %v413
        %v424 = vpop.permute.xlu0 %423
        %427 = vset.pattern.permute.xlu0 0
        %428 = vperm.xlu0 %427, %v414
        %v429 = vpop.permute.xlu0 %428
        %432 = vset.pattern.permute.xlu0 0
        %433 = vperm.xlu0 %432, %v415
        %v434 = vpop.permute.xlu0 %433
        %v436 = vld [vmem:[%s8] sm:$0xff]
        %v437 = vld [vmem:[%s8 + $0x8] sm:$0xff]
        %439 = vset.pattern.permute.xlu0 0
        %440 = vperm.xlu0 %439, %v436
        %v441 = vpop.permute.xlu0 %440
        %444 = vset.pattern.permute.xlu0 0
        %445 = vperm.xlu0 %444, %v437
        %v446 = vpop.permute.xlu0 %445
        loop: start=0, step=1, limit=4
        $region61: #{tpu_custom_call.1} parent=55 // loop_pre_header
          _
        $region62: #{tpu_custom_call.1} parent=55 // loop_header
          %s449 = sphi 0, %s453
          %p450 = scmp.ge.s32.totalorder %s449, 4
        $region63: #{tpu_custom_call.1} parent=55 // loop_header_branch
          %452 = sbr.rel (%p450) target = $region67
        $region64: #{tpu_custom_call.1} parent=55 // loop_body
          %s454 = smul.u32 %s449, 16
          %s455 = smul.addr %s454, 8
          %s456 = scalar_lea.vmem %s318, %s455 [#allocation2]
          %v457 = vld [vmem:[%s456] sm:$0xff]
          %v458 = vld [vmem:[%s456 + $0x8] sm:$0xff]
          %v459 = vld [vmem:[%s456 + $0x10] sm:$0xff]
          %v460 = vld [vmem:[%s456 + $0x18] sm:$0xff]
          %v461 = vld [vmem:[%s456 + $0x20] sm:$0xff]
          %v462 = vld [vmem:[%s456 + $0x28] sm:$0xff]
          %v463 = vld [vmem:[%s456 + $0x30] sm:$0xff]
          %v464 = vld [vmem:[%s456 + $0x38] sm:$0xff]
          %v465 = vld [vmem:[%s456 + $0x40] sm:$0xff]
          %v466 = vld [vmem:[%s456 + $0x48] sm:$0xff]
          %v467 = vld [vmem:[%s456 + $0x50] sm:$0xff]
          %v468 = vld [vmem:[%s456 + $0x58] sm:$0xff]
          %v469 = vld [vmem:[%s456 + $0x60] sm:$0xff]
          %v470 = vld [vmem:[%s456 + $0x68] sm:$0xff]
          %v471 = vld [vmem:[%s456 + $0x70] sm:$0xff]
          %v472 = vld [vmem:[%s456 + $0x78] sm:$0xff]
          %v473 = vadd.f32 %v457, %v458
          %v474 = vadd.f32 %v473, %v459
          %v475 = vadd.f32 %v474, %v460
          %v476 = vadd.f32 %v475, %v461
          %v477 = vadd.f32 %v476, %v462
          %v478 = vadd.f32 %v477, %v463
          %v479 = vadd.f32 %v478, %v464
          %v480 = vadd.f32 %v479, %v465
          %v481 = vadd.f32 %v480, %v466
          %v482 = vadd.f32 %v481, %v467
          %v483 = vadd.f32 %v482, %v468
          %v484 = vadd.f32 %v483, %v469
          %v485 = vadd.f32 %v484, %v470
          %v486 = vadd.f32 %v485, %v471
          %v487 = vadd.f32 %v486, %v472
          %488 = vadd.xlane.f32.xlu0 %v487
          %v489 = vpop.xlane.xlu0 %488
          %v490 = vrot.slane %v489, 4
          %v491 = vadd.f32 %v489, %v490
          %v492 = vrot.slane %v491, 2
          %v493 = vadd.f32 %v491, %v492
          %v494 = vrot.slane %v493, 1
          %v495 = vadd.f32 %v493, %v494
          %s496 = vtos %v495
          %v497 = vstv %s496
          %v498 = vmul.f32 %v497, 6.1035156e-05
          %v499 = vsub.f32 %v457, %v498
          %v500 = vsub.f32 %v458, %v498
          %v501 = vsub.f32 %v459, %v498
          %v502 = vsub.f32 %v460, %v498
          %v503 = vsub.f32 %v461, %v498
          %v504 = vsub.f32 %v462, %v498
          %v505 = vsub.f32 %v463, %v498
          %v506 = vsub.f32 %v464, %v498
          %v507 = vsub.f32 %v465, %v498
          %v508 = vsub.f32 %v466, %v498
          %v509 = vsub.f32 %v467, %v498
          %v510 = vsub.f32 %v468, %v498
          %v511 = vsub.f32 %v469, %v498
          %v512 = vsub.f32 %v470, %v498
          %v513 = vsub.f32 %v471, %v498
          %v514 = vsub.f32 %v472, %v498
          %v515 = vmul.f32 %v499, %v499
          %v516 = vmul.f32 %v500, %v500
          %v517 = vmul.f32 %v501, %v501
          %v518 = vmul.f32 %v502, %v502
          %v519 = vmul.f32 %v503, %v503
          %v520 = vmul.f32 %v504, %v504
          %v521 = vmul.f32 %v505, %v505
          %v522 = vmul.f32 %v506, %v506
          %v523 = vmul.f32 %v507, %v507
          %v524 = vmul.f32 %v508, %v508
          %v525 = vmul.f32 %v509, %v509
          %v526 = vmul.f32 %v510, %v510
          %v527 = vmul.f32 %v511, %v511
          %v528 = vmul.f32 %v512, %v512
          %v529 = vmul.f32 %v513, %v513
          %v530 = vmul.f32 %v514, %v514
          %v531 = vadd.f32 %v515, %v516
          %v532 = vadd.f32 %v531, %v517
          %v533 = vadd.f32 %v532, %v518
          %v534 = vadd.f32 %v533, %v519
          %v535 = vadd.f32 %v534, %v520
          %v536 = vadd.f32 %v535, %v521
          %v537 = vadd.f32 %v536, %v522
          %v538 = vadd.f32 %v537, %v523
          %v539 = vadd.f32 %v538, %v524
          %v540 = vadd.f32 %v539, %v525
          %v541 = vadd.f32 %v540, %v526
          %v542 = vadd.f32 %v541, %v527
          %v543 = vadd.f32 %v542, %v528
          %v544 = vadd.f32 %v543, %v529
          %v545 = vadd.f32 %v544, %v530
          %546 = vadd.xlane.f32.xlu0 %v545
          %v547 = vpop.xlane.xlu0 %546
          %v548 = vrot.slane %v547, 4
          %v549 = vadd.f32 %v547, %v548
          %v550 = vrot.slane %v549, 2
          %v551 = vadd.f32 %v549, %v550
          %v552 = vrot.slane %v551, 1
          %v553 = vadd.f32 %v551, %v552
          %s554 = vtos %v553
          %v555 = vstv %s554
          %v556 = vmul.f32 %v555, 6.1035156e-05
          %v557 = vadd.f32 %v556, 1e-05
          %v558 = vrsqrt.pop %v557
          %v559 = vmul.f32 %v558, %v557
          %v560 = vmul.f32 %v559, %v558
          %v561 = vmul.f32 0.5, %v560
          %v562 = vsub.f32 1.5, %v561
          %v563 = vmul.f32 %v558, %v562
          %vm564 = vweird.f32 %v557
          %vm565 = vweird.f32 %v558
          %vm566 = vmor %vm564, %vm565
          %v567 = vsel %vm566, %v558, %v563
          %v568 = vmul.f32 %v499, %v567
          %v569 = vmul.f32 %v500, %v567
          %v570 = vmul.f32 %v501, %v567
          %v571 = vmul.f32 %v502, %v567
          %v572 = vmul.f32 %v503, %v567
          %v573 = vmul.f32 %v504, %v567
          %v574 = vmul.f32 %v505, %v567
          %v575 = vmul.f32 %v506, %v567
          %v576 = vmul.f32 %v507, %v567
          %v577 = vmul.f32 %v508, %v567
          %v578 = vmul.f32 %v509, %v567
          %v579 = vmul.f32 %v510, %v567
          %v580 = vmul.f32 %v511, %v567
          %v581 = vmul.f32 %v512, %v567
          %v582 = vmul.f32 %v513, %v567
          %v583 = vmul.f32 %v514, %v567
          %v584 = vpack.c.bf16 %v576, %v568
          %v585 = vpack.c.bf16 %v577, %v569
          %v586 = vpack.c.bf16 %v578, %v570
          %v587 = vpack.c.bf16 %v579, %v571
          %v588 = vpack.c.bf16 %v580, %v572
          %v589 = vpack.c.bf16 %v581, %v573
          %v590 = vpack.c.bf16 %v582, %v574
          %v591 = vpack.c.bf16 %v583, %v575
          %v597 = vunpack.c.l.b16 %v357
          %v598 = vunpack.c.l.b16 %v358
          %v599 = vunpack.c.l.b16 %v359
          %v600 = vunpack.c.l.b16 %v360
          %v601 = vunpack.c.l.b16 %v361
          %v602 = vpack.c.b16 %v598, %v597
          %v603 = vpack.c.b16 %v600, %v599
          %v604 = vpack.c.b16 %v601, %v601
          %vm605 = vcmask 130048
          %v607 = vsel %vm605, %v602, 0
          %v610 = vsel %vm605, %v603, 0
          %v613 = vsel %vm605, %v604, 0
          %615 = vmatpush.bf16.msra.mxu0 0
          %616 = vmatpush.bf16.msra.mxu0 0
          %617 = vmatpush.bf16.msra.mxu0 0
          %618 = vmatpush.bf16.msra.mxu0 0
          %619 = vmatpush.bf16.msra.mxu0 0
          %620 = vmatpush.bf16.msra.mxu0 0
          %621 = vmatpush.bf16.msra.mxu0 0
          %622 = vmatpush.bf16.msra.mxu0 %v584
          %623 = vmatmul.bf16.gmra.mxu0 %v607
          %v624 = vpop.f32.mrf.mxu0
          %v625 = vadd.f32 %v378, %v624
          %v626 = vpop.f32.mrf.mxu0
          %v627 = vadd.f32 %v383, %v626
          %628 = vmatmul.bf16.gmra.mxu0 %v610
          %v629 = vpop.f32.mrf.mxu0
          %v630 = vadd.f32 %v388, %v629
          %v631 = vpop.f32.mrf.mxu0
          %v632 = vadd.f32 %v393, %v631
          %633 = vmatmul.bf16.gmra.mxu0 %v613
          %v634 = vpop.f32.mrf.mxu0
          %v635 = vadd.f32 %v398, %v634
          %v636 = vpop.f32.mrf.mxu0
          %637 = vdwg.mxu0
          %638 = vmatpush.bf16.msra.mxu0 0
          %639 = vmatpush.bf16.msra.mxu0 0
          %640 = vmatpush.bf16.msra.mxu0 0
          %641 = vmatpush.bf16.msra.mxu0 0
          %642 = vmatpush.bf16.msra.mxu0 0
          %643 = vmatpush.bf16.msra.mxu0 0
          %644 = vmatpush.bf16.msra.mxu0 0
          %645 = vmatpush.bf16.msra.mxu0 %v585
          %646 = vmatmul.bf16.gmra.mxu0 %v607
          %v647 = vpop.f32.mrf.mxu0
          %v648 = vadd.f32 %v378, %v647
          %v649 = vpop.f32.mrf.mxu0
          %v650 = vadd.f32 %v383, %v649
          %651 = vmatmul.bf16.gmra.mxu0 %v610
          %v652 = vpop.f32.mrf.mxu0
          %v653 = vadd.f32 %v388, %v652
          %v654 = vpop.f32.mrf.mxu0
          %v655 = vadd.f32 %v393, %v654
          %656 = vmatmul.bf16.gmra.mxu0 %v613
          %v657 = vpop.f32.mrf.mxu0
          %v658 = vadd.f32 %v398, %v657
          %v659 = vpop.f32.mrf.mxu0
          %660 = vdwg.mxu0
          %661 = vmatpush.bf16.msra.mxu0 0
          %662 = vmatpush.bf16.msra.mxu0 0
          %663 = vmatpush.bf16.msra.mxu0 0
          %664 = vmatpush.bf16.msra.mxu0 0
          %665 = vmatpush.bf16.msra.mxu0 0
          %666 = vmatpush.bf16.msra.mxu0 0
          %667 = vmatpush.bf16.msra.mxu0 0
          %668 = vmatpush.bf16.msra.mxu0 %v586
          %669 = vmatmul.bf16.gmra.mxu0 %v607
          %v670 = vpop.f32.mrf.mxu0
          %v671 = vadd.f32 %v378, %v670
          %v672 = vpop.f32.mrf.mxu0
          %v673 = vadd.f32 %v383, %v672
          %674 = vmatmul.bf16.gmra.mxu0 %v610
          %v675 = vpop.f32.mrf.mxu0
          %v676 = vadd.f32 %v388, %v675
          %v677 = vpop.f32.mrf.mxu0
          %v678 = vadd.f32 %v393, %v677
          %679 = vmatmul.bf16.gmra.mxu0 %v613
          %v680 = vpop.f32.mrf.mxu0
          %v681 = vadd.f32 %v398, %v680
          %v682 = vpop.f32.mrf.mxu0
          %683 = vdwg.mxu0
          %684 = vmatpush.bf16.msra.mxu0 0
          %685 = vmatpush.bf16.msra.mxu0 0
          %686 = vmatpush.bf16.msra.mxu0 0
          %687 = vmatpush.bf16.msra.mxu0 0
          %688 = vmatpush.bf16.msra.mxu0 0
          %689 = vmatpush.bf16.msra.mxu0 0
          %690 = vmatpush.bf16.msra.mxu0 0
          %691 = vmatpush.bf16.msra.mxu0 %v587
          %692 = vmatmul.bf16.gmra.mxu0 %v607
          %v693 = vpop.f32.mrf.mxu0
          %v694 = vadd.f32 %v378, %v693
          %v695 = vpop.f32.mrf.mxu0
          %v696 = vadd.f32 %v383, %v695
          %697 = vmatmul.bf16.gmra.mxu0 %v610
          %v698 = vpop.f32.mrf.mxu0
          %v699 = vadd.f32 %v388, %v698
          %v700 = vpop.f32.mrf.mxu0
          %v701 = vadd.f32 %v393, %v700
          %702 = vmatmul.bf16.gmra.mxu0 %v613
          %v703 = vpop.f32.mrf.mxu0
          %v704 = vadd.f32 %v398, %v703
          %v705 = vpop.f32.mrf.mxu0
          %706 = vdwg.mxu0
          %707 = vmatpush.bf16.msra.mxu0 0
          %708 = vmatpush.bf16.msra.mxu0 0
          %709 = vmatpush.bf16.msra.mxu0 0
          %710 = vmatpush.bf16.msra.mxu0 0
          %711 = vmatpush.bf16.msra.mxu0 0
          %712 = vmatpush.bf16.msra.mxu0 0
          %713 = vmatpush.bf16.msra.mxu0 0
          %714 = vmatpush.bf16.msra.mxu0 %v588
          %715 = vmatmul.bf16.gmra.mxu0 %v607
          %v716 = vpop.f32.mrf.mxu0
          %v717 = vadd.f32 %v378, %v716
          %v718 = vpop.f32.mrf.mxu0
          %v719 = vadd.f32 %v383, %v718
          %720 = vmatmul.bf16.gmra.mxu0 %v610
          %v721 = vpop.f32.mrf.mxu0
          %v722 = vadd.f32 %v388, %v721
          %v723 = vpop.f32.mrf.mxu0
          %v724 = vadd.f32 %v393, %v723
          %725 = vmatmul.bf16.gmra.mxu0 %v613
          %v726 = vpop.f32.mrf.mxu0
          %v727 = vadd.f32 %v398, %v726
          %v728 = vpop.f32.mrf.mxu0
          %729 = vdwg.mxu0
          %730 = vmatpush.bf16.msra.mxu0 0
          %731 = vmatpush.bf16.msra.mxu0 0
          %732 = vmatpush.bf16.msra.mxu0 0
          %733 = vmatpush.bf16.msra.mxu0 0
          %734 = vmatpush.bf16.msra.mxu0 0
          %735 = vmatpush.bf16.msra.mxu0 0
          %736 = vmatpush.bf16.msra.mxu0 0
          %737 = vmatpush.bf16.msra.mxu0 %v589
          %738 = vmatmul.bf16.gmra.mxu0 %v607
          %v739 = vpop.f32.mrf.mxu0
          %v740 = vadd.f32 %v378, %v739
          %v741 = vpop.f32.mrf.mxu0
          %v742 = vadd.f32 %v383, %v741
          %743 = vmatmul.bf16.gmra.mxu0 %v610
          %v744 = vpop.f32.mrf.mxu0
          %v745 = vadd.f32 %v388, %v744
          %v746 = vpop.f32.mrf.mxu0
          %v747 = vadd.f32 %v393, %v746
          %748 = vmatmul.bf16.gmra.mxu0 %v613
          %v749 = vpop.f32.mrf.mxu0
          %v750 = vadd.f32 %v398, %v749
          %v751 = vpop.f32.mrf.mxu0
          %752 = vdwg.mxu0
          %753 = vmatpush.bf16.msra.mxu0 0
          %754 = vmatpush.bf16.msra.mxu0 0
          %755 = vmatpush.bf16.msra.mxu0 0
          %756 = vmatpush.bf16.msra.mxu0 0
          %757 = vmatpush.bf16.msra.mxu0 0
          %758 = vmatpush.bf16.msra.mxu0 0
          %759 = vmatpush.bf16.msra.mxu0 0
          %760 = vmatpush.bf16.msra.mxu0 %v590
          %761 = vmatmul.bf16.gmra.mxu0 %v607
          %v762 = vpop.f32.mrf.mxu0
          %v763 = vadd.f32 %v378, %v762
          %v764 = vpop.f32.mrf.mxu0
          %v765 = vadd.f32 %v383, %v764
          %766 = vmatmul.bf16.gmra.mxu0 %v610
          %v767 = vpop.f32.mrf.mxu0
          %v768 = vadd.f32 %v388, %v767
          %v769 = vpop.f32.mrf.mxu0
          %v770 = vadd.f32 %v393, %v769
          %771 = vmatmul.bf16.gmra.mxu0 %v613
          %v772 = vpop.f32.mrf.mxu0
          %v773 = vadd.f32 %v398, %v772
          %v774 = vpop.f32.mrf.mxu0
          %775 = vdwg.mxu0
          %776 = vmatpush.bf16.msra.mxu0 0
          %777 = vmatpush.bf16.msra.mxu0 0
          %778 = vmatpush.bf16.msra.mxu0 0
          %779 = vmatpush.bf16.msra.mxu0 0
          %780 = vmatpush.bf16.msra.mxu0 0
          %781 = vmatpush.bf16.msra.mxu0 0
          %782 = vmatpush.bf16.msra.mxu0 0
          %783 = vmatpush.bf16.msra.mxu0 %v591
          %784 = vmatmul.bf16.gmra.mxu0 %v607
          %v785 = vpop.f32.mrf.mxu0
          %v786 = vadd.f32 %v378, %v785
          %v787 = vpop.f32.mrf.mxu0
          %v788 = vadd.f32 %v383, %v787
          %789 = vmatmul.bf16.gmra.mxu0 %v610
          %v790 = vpop.f32.mrf.mxu0
          %v791 = vadd.f32 %v388, %v790
          %v792 = vpop.f32.mrf.mxu0
          %v793 = vadd.f32 %v393, %v792
          %794 = vmatmul.bf16.gmra.mxu0 %v613
          %v795 = vpop.f32.mrf.mxu0
          %v796 = vadd.f32 %v398, %v795
          %v797 = vpop.f32.mrf.mxu0
          %798 = vdwg.mxu0
          %v799 = vmax.f32 %v630, 0.0
          %v800 = vmax.f32 %v653, 0.0
          %v801 = vmax.f32 %v676, 0.0
          %v802 = vmax.f32 %v699, 0.0
          %v803 = vmax.f32 %v722, 0.0
          %v804 = vmax.f32 %v745, 0.0
          %v805 = vmax.f32 %v768, 0.0
          %v806 = vmax.f32 %v791, 0.0
          %v807 = vmax.f32 %v632, 0.0
          %v808 = vmax.f32 %v655, 0.0
          %v809 = vmax.f32 %v678, 0.0
          %v810 = vmax.f32 %v701, 0.0
          %v811 = vmax.f32 %v724, 0.0
          %v812 = vmax.f32 %v747, 0.0
          %v813 = vmax.f32 %v770, 0.0
          %v814 = vmax.f32 %v793, 0.0
          %vm815 = vcmask 1040384
          %v816 = vsel %vm815, %v635, -inf
          %817 = vmax.xlane.f32.xlu0 %v816
          %v818 = vpop.xlane.xlu0 %817
          %v819 = vrot.slane %v818, 4
          %v820 = vmax.f32 %v818, %v819
          %v821 = vrot.slane %v820, 2
          %v822 = vmax.f32 %v820, %v821
          %v823 = vrot.slane %v822, 1
          %v824 = vmax.f32 %v822, %v823
          %s825 = vtos %v824
          %v826 = vstv %s825
          %v827 = vsub.f32 %v635, %v826
          %v828 = vmul.f32 %v827, 1.442695
          %v829 = vpow.pop %v828
          %v830 = vsel %vm815, %v829, 0.0
          %831 = vadd.xlane.f32.xlu0 %v830
          %v832 = vpop.xlane.xlu0 %831
          %v833 = vrot.slane %v832, 4
          %v834 = vadd.f32 %v832, %v833
          %v835 = vrot.slane %v834, 2
          %v836 = vadd.f32 %v834, %v835
          %v837 = vrot.slane %v836, 1
          %v838 = vadd.f32 %v836, %v837
          %s839 = vtos %v838
          %v840 = vperm.slane %v829, 0
          %v841 = vmul.f32 %v625, %v840
          %v842 = vmul.f32 %v627, %v840
          %843 = vadd.xlane.f32.xlu0 %v841
          %v844 = vpop.xlane.xlu0 %843
          %845 = vadd.xlane.f32.xlu0 %v842
          %v846 = vpop.xlane.xlu0 %845
          %v847 = vstv %s839
          %v848 = vrcp.pop %v847
          %v849 = vmul.f32 %v847, %v848
          %v850 = vsub.f32 1.0, %v849
          %v851 = vmul.f32 %v848, %v850
          %v852 = vadd.f32 %v848, %v851
          %vm853 = vweird.f32 %v847
          %vm854 = vweird.f32 %v848
          %vm855 = vmor %vm853, %vm854
          %v856 = vsel %vm855, %v848, %v852
          %v857 = vand.u32 2147483647, %v847
          %vm858 = vcmp.eq.f32.partialorder %v857, 8.507059e+37
          %v859 = vand.u32 %v847, 2147483648
          %v860 = vor.u32 1.1754944e-38, %v859
          %v861 = vsel %vm858, %v860, %v856
          %v862 = vmul.f32 %v844, %v861
          %v863 = vmul.f32 %v846, %v861
          %v864 = vmul.f32 %v799, %v862
          %v865 = vmul.f32 %v807, %v863
          %v866 = vsel %vm815, %v658, -inf
          %867 = vmax.xlane.f32.xlu0 %v866
          %v868 = vpop.xlane.xlu0 %867
          %v869 = vrot.slane %v868, 4
          %v870 = vmax.f32 %v868, %v869
          %v871 = vrot.slane %v870, 2
          %v872 = vmax.f32 %v870, %v871
          %v873 = vrot.slane %v872, 1
          %v874 = vmax.f32 %v872, %v873
          %s875 = vtos %v874
          %v876 = vstv %s875
          %v877 = vsub.f32 %v658, %v876
          %v878 = vmul.f32 %v877, 1.442695
          %v879 = vpow.pop %v878
          %v880 = vsel %vm815, %v879, 0.0
          %881 = vadd.xlane.f32.xlu0 %v880
          %v882 = vpop.xlane.xlu0 %881
          %v883 = vrot.slane %v882, 4
          %v884 = vadd.f32 %v882, %v883
          %v885 = vrot.slane %v884, 2
          %v886 = vadd.f32 %v884, %v885
          %v887 = vrot.slane %v886, 1
          %v888 = vadd.f32 %v886, %v887
          %s889 = vtos %v888
          %v890 = vperm.slane %v879, 0
          %v891 = vmul.f32 %v648, %v890
          %v892 = vmul.f32 %v650, %v890
          %893 = vadd.xlane.f32.xlu0 %v891
          %v894 = vpop.xlane.xlu0 %893
          %895 = vadd.xlane.f32.xlu0 %v892
          %v896 = vpop.xlane.xlu0 %895
          %v897 = vstv %s889
          %v898 = vrcp.pop %v897
          %v899 = vmul.f32 %v897, %v898
          %v900 = vsub.f32 1.0, %v899
          %v901 = vmul.f32 %v898, %v900
          %v902 = vadd.f32 %v898, %v901
          %vm903 = vweird.f32 %v897
          %vm904 = vweird.f32 %v898
          %vm905 = vmor %vm903, %vm904
          %v906 = vsel %vm905, %v898, %v902
          %v907 = vand.u32 2147483647, %v897
          %vm908 = vcmp.eq.f32.partialorder %v907, 8.507059e+37
          %v909 = vand.u32 %v897, 2147483648
          %v910 = vor.u32 1.1754944e-38, %v909
          %v911 = vsel %vm908, %v910, %v906
          %v912 = vmul.f32 %v894, %v911
          %v913 = vmul.f32 %v896, %v911
          %v914 = vmul.f32 %v800, %v912
          %v915 = vmul.f32 %v808, %v913
          %v916 = vsel %vm815, %v681, -inf
          %917 = vmax.xlane.f32.xlu0 %v916
          %v918 = vpop.xlane.xlu0 %917
          %v919 = vrot.slane %v918, 4
          %v920 = vmax.f32 %v918, %v919
          %v921 = vrot.slane %v920, 2
          %v922 = vmax.f32 %v920, %v921
          %v923 = vrot.slane %v922, 1
          %v924 = vmax.f32 %v922, %v923
          %s925 = vtos %v924
          %v926 = vstv %s925
          %v927 = vsub.f32 %v681, %v926
          %v928 = vmul.f32 %v927, 1.442695
          %v929 = vpow.pop %v928
          %v930 = vsel %vm815, %v929, 0.0
          %931 = vadd.xlane.f32.xlu0 %v930
          %v932 = vpop.xlane.xlu0 %931
          %v933 = vrot.slane %v932, 4
          %v934 = vadd.f32 %v932, %v933
          %v935 = vrot.slane %v934, 2
          %v936 = vadd.f32 %v934, %v935
          %v937 = vrot.slane %v936, 1
          %v938 = vadd.f32 %v936, %v937
          %s939 = vtos %v938
          %v940 = vperm.slane %v929, 0
          %v941 = vmul.f32 %v671, %v940
          %v942 = vmul.f32 %v673, %v940
          %943 = vadd.xlane.f32.xlu0 %v941
          %v944 = vpop.xlane.xlu0 %943
          %945 = vadd.xlane.f32.xlu0 %v942
          %v946 = vpop.xlane.xlu0 %945
          %v947 = vstv %s939
          %v948 = vrcp.pop %v947
          %v949 = vmul.f32 %v947, %v948
          %v950 = vsub.f32 1.0, %v949
          %v951 = vmul.f32 %v948, %v950
          %v952 = vadd.f32 %v948, %v951
          %vm953 = vweird.f32 %v947
          %vm954 = vweird.f32 %v948
          %vm955 = vmor %vm953, %vm954
          %v956 = vsel %vm955, %v948, %v952
          %v957 = vand.u32 2147483647, %v947
          %vm958 = vcmp.eq.f32.partialorder %v957, 8.507059e+37
          %v959 = vand.u32 %v947, 2147483648
          %v960 = vor.u32 1.1754944e-38, %v959
          %v961 = vsel %vm958, %v960, %v956
          %v962 = vmul.f32 %v944, %v961
          %v963 = vmul.f32 %v946, %v961
          %v964 = vmul.f32 %v801, %v962
          %v965 = vmul.f32 %v809, %v963
          %v966 = vsel %vm815, %v704, -inf
          %967 = vmax.xlane.f32.xlu0 %v966
          %v968 = vpop.xlane.xlu0 %967
          %v969 = vrot.slane %v968, 4
          %v970 = vmax.f32 %v968, %v969
          %v971 = vrot.slane %v970, 2
          %v972 = vmax.f32 %v970, %v971
          %v973 = vrot.slane %v972, 1
          %v974 = vmax.f32 %v972, %v973
          %s975 = vtos %v974
          %v976 = vstv %s975
          %v977 = vsub.f32 %v704, %v976
          %v978 = vmul.f32 %v977, 1.442695
          %v979 = vpow.pop %v978
          %v980 = vsel %vm815, %v979, 0.0
          %981 = vadd.xlane.f32.xlu0 %v980
          %v982 = vpop.xlane.xlu0 %981
          %v983 = vrot.slane %v982, 4
          %v984 = vadd.f32 %v982, %v983
          %v985 = vrot.slane %v984, 2
          %v986 = vadd.f32 %v984, %v985
          %v987 = vrot.slane %v986, 1
          %v988 = vadd.f32 %v986, %v987
          %s989 = vtos %v988
          %v990 = vperm.slane %v979, 0
          %v991 = vmul.f32 %v694, %v990
          %v992 = vmul.f32 %v696, %v990
          %993 = vadd.xlane.f32.xlu0 %v991
          %v994 = vpop.xlane.xlu0 %993
          %995 = vadd.xlane.f32.xlu0 %v992
          %v996 = vpop.xlane.xlu0 %995
          %v997 = vstv %s989
          %v998 = vrcp.pop %v997
          %v999 = vmul.f32 %v997, %v998
          %v1000 = vsub.f32 1.0, %v999
          %v1001 = vmul.f32 %v998, %v1000
          %v1002 = vadd.f32 %v998, %v1001
          %vm1003 = vweird.f32 %v997
          %vm1004 = vweird.f32 %v998
          %vm1005 = vmor %vm1003, %vm1004
          %v1006 = vsel %vm1005, %v998, %v1002
          %v1007 = vand.u32 2147483647, %v997
          %vm1008 = vcmp.eq.f32.partialorder %v1007, 8.507059e+37
          %v1009 = vand.u32 %v997, 2147483648
          %v1010 = vor.u32 1.1754944e-38, %v1009
          %v1011 = vsel %vm1008, %v1010, %v1006
          %v1012 = vmul.f32 %v994, %v1011
          %v1013 = vmul.f32 %v996, %v1011
          %v1014 = vmul.f32 %v802, %v1012
          %v1015 = vmul.f32 %v810, %v1013
          %v1016 = vsel %vm815, %v727, -inf
          %1017 = vmax.xlane.f32.xlu0 %v1016
          %v1018 = vpop.xlane.xlu0 %1017
          %v1019 = vrot.slane %v1018, 4
          %v1020 = vmax.f32 %v1018, %v1019
          %v1021 = vrot.slane %v1020, 2
          %v1022 = vmax.f32 %v1020, %v1021
          %v1023 = vrot.slane %v1022, 1
          %v1024 = vmax.f32 %v1022, %v1023
          %s1025 = vtos %v1024
          %v1026 = vstv %s1025
          %v1027 = vsub.f32 %v727, %v1026
          %v1028 = vmul.f32 %v1027, 1.442695
          %v1029 = vpow.pop %v1028
          %v1030 = vsel %vm815, %v1029, 0.0
          %1031 = vadd.xlane.f32.xlu0 %v1030
          %v1032 = vpop.xlane.xlu0 %1031
          %v1033 = vrot.slane %v1032, 4
          %v1034 = vadd.f32 %v1032, %v1033
          %v1035 = vrot.slane %v1034, 2
          %v1036 = vadd.f32 %v1034, %v1035
          %v1037 = vrot.slane %v1036, 1
          %v1038 = vadd.f32 %v1036, %v1037
          %s1039 = vtos %v1038
          %v1040 = vperm.slane %v1029, 0
          %v1041 = vmul.f32 %v717, %v1040
          %v1042 = vmul.f32 %v719, %v1040
          %1043 = vadd.xlane.f32.xlu0 %v1041
          %v1044 = vpop.xlane.xlu0 %1043
          %1045 = vadd.xlane.f32.xlu0 %v1042
          %v1046 = vpop.xlane.xlu0 %1045
          %v1047 = vstv %s1039
          %v1048 = vrcp.pop %v1047
          %v1049 = vmul.f32 %v1047, %v1048
          %v1050 = vsub.f32 1.0, %v1049
          %v1051 = vmul.f32 %v1048, %v1050
          %v1052 = vadd.f32 %v1048, %v1051
          %vm1053 = vweird.f32 %v1047
          %vm1054 = vweird.f32 %v1048
          %vm1055 = vmor %vm1053, %vm1054
          %v1056 = vsel %vm1055, %v1048, %v1052
          %v1057 = vand.u32 2147483647, %v1047
          %vm1058 = vcmp.eq.f32.partialorder %v1057, 8.507059e+37
          %v1059 = vand.u32 %v1047, 2147483648
          %v1060 = vor.u32 1.1754944e-38, %v1059
          %v1061 = vsel %vm1058, %v1060, %v1056
          %v1062 = vmul.f32 %v1044, %v1061
          %v1063 = vmul.f32 %v1046, %v1061
          %v1064 = vmul.f32 %v803, %v1062
          %v1065 = vmul.f32 %v811, %v1063
          %v1066 = vsel %vm815, %v750, -inf
          %1067 = vmax.xlane.f32.xlu0 %v1066
          %v1068 = vpop.xlane.xlu0 %1067
          %v1069 = vrot.slane %v1068, 4
          %v1070 = vmax.f32 %v1068, %v1069
          %v1071 = vrot.slane %v1070, 2
          %v1072 = vmax.f32 %v1070, %v1071
          %v1073 = vrot.slane %v1072, 1
          %v1074 = vmax.f32 %v1072, %v1073
          %s1075 = vtos %v1074
          %v1076 = vstv %s1075
          %v1077 = vsub.f32 %v750, %v1076
          %v1078 = vmul.f32 %v1077, 1.442695
          %v1079 = vpow.pop %v1078
          %v1080 = vsel %vm815, %v1079, 0.0
          %1081 = vadd.xlane.f32.xlu0 %v1080
          %v1082 = vpop.xlane.xlu0 %1081
          %v1083 = vrot.slane %v1082, 4
          %v1084 = vadd.f32 %v1082, %v1083
          %v1085 = vrot.slane %v1084, 2
          %v1086 = vadd.f32 %v1084, %v1085
          %v1087 = vrot.slane %v1086, 1
          %v1088 = vadd.f32 %v1086, %v1087
          %s1089 = vtos %v1088
          %v1090 = vperm.slane %v1079, 0
          %v1091 = vmul.f32 %v740, %v1090
          %v1092 = vmul.f32 %v742, %v1090
          %1093 = vadd.xlane.f32.xlu0 %v1091
          %v1094 = vpop.xlane.xlu0 %1093
          %1095 = vadd.xlane.f32.xlu0 %v1092
          %v1096 = vpop.xlane.xlu0 %1095
          %v1097 = vstv %s1089
          %v1098 = vrcp.pop %v1097
          %v1099 = vmul.f32 %v1097, %v1098
          %v1100 = vsub.f32 1.0, %v1099
          %v1101 = vmul.f32 %v1098, %v1100
          %v1102 = vadd.f32 %v1098, %v1101
          %vm1103 = vweird.f32 %v1097
          %vm1104 = vweird.f32 %v1098
          %vm1105 = vmor %vm1103, %vm1104
          %v1106 = vsel %vm1105, %v1098, %v1102
          %v1107 = vand.u32 2147483647, %v1097
          %vm1108 = vcmp.eq.f32.partialorder %v1107, 8.507059e+37
          %v1109 = vand.u32 %v1097, 2147483648
          %v1110 = vor.u32 1.1754944e-38, %v1109
          %v1111 = vsel %vm1108, %v1110, %v1106
          %v1112 = vmul.f32 %v1094, %v1111
          %v1113 = vmul.f32 %v1096, %v1111
          %v1114 = vmul.f32 %v804, %v1112
          %v1115 = vmul.f32 %v812, %v1113
          %v1116 = vsel %vm815, %v773, -inf
          %1117 = vmax.xlane.f32.xlu0 %v1116
          %v1118 = vpop.xlane.xlu0 %1117
          %v1119 = vrot.slane %v1118, 4
          %v1120 = vmax.f32 %v1118, %v1119
          %v1121 = vrot.slane %v1120, 2
          %v1122 = vmax.f32 %v1120, %v1121
          %v1123 = vrot.slane %v1122, 1
          %v1124 = vmax.f32 %v1122, %v1123
          %s1125 = vtos %v1124
          %v1126 = vstv %s1125
          %v1127 = vsub.f32 %v773, %v1126
          %v1128 = vmul.f32 %v1127, 1.442695
          %v1129 = vpow.pop %v1128
          %v1130 = vsel %vm815, %v1129, 0.0
          %1131 = vadd.xlane.f32.xlu0 %v1130
          %v1132 = vpop.xlane.xlu0 %1131
          %v1133 = vrot.slane %v1132, 4
          %v1134 = vadd.f32 %v1132, %v1133
          %v1135 = vrot.slane %v1134, 2
          %v1136 = vadd.f32 %v1134, %v1135
          %v1137 = vrot.slane %v1136, 1
          %v1138 = vadd.f32 %v1136, %v1137
          %s1139 = vtos %v1138
          %v1140 = vperm.slane %v1129, 0
          %v1141 = vmul.f32 %v763, %v1140
          %v1142 = vmul.f32 %v765, %v1140
          %1143 = vadd.xlane.f32.xlu0 %v1141
          %v1144 = vpop.xlane.xlu0 %1143
          %1145 = vadd.xlane.f32.xlu0 %v1142
          %v1146 = vpop.xlane.xlu0 %1145
          %v1147 = vstv %s1139
          %v1148 = vrcp.pop %v1147
          %v1149 = vmul.f32 %v1147, %v1148
          %v1150 = vsub.f32 1.0, %v1149
          %v1151 = vmul.f32 %v1148, %v1150
          %v1152 = vadd.f32 %v1148, %v1151
          %vm1153 = vweird.f32 %v1147
          %vm1154 = vweird.f32 %v1148
          %vm1155 = vmor %vm1153, %vm1154
          %v1156 = vsel %vm1155, %v1148, %v1152
          %v1157 = vand.u32 2147483647, %v1147
          %vm1158 = vcmp.eq.f32.partialorder %v1157, 8.507059e+37
          %v1159 = vand.u32 %v1147, 2147483648
          %v1160 = vor.u32 1.1754944e-38, %v1159
          %v1161 = vsel %vm1158, %v1160, %v1156
          %v1162 = vmul.f32 %v1144, %v1161
          %v1163 = vmul.f32 %v1146, %v1161
          %v1164 = vmul.f32 %v805, %v1162
          %v1165 = vmul.f32 %v813, %v1163
          %v1166 = vsel %vm815, %v796, -inf
          %1167 = vmax.xlane.f32.xlu0 %v1166
          %v1168 = vpop.xlane.xlu0 %1167
          %v1169 = vrot.slane %v1168, 4
          %v1170 = vmax.f32 %v1168, %v1169
          %v1171 = vrot.slane %v1170, 2
          %v1172 = vmax.f32 %v1170, %v1171
          %v1173 = vrot.slane %v1172, 1
          %v1174 = vmax.f32 %v1172, %v1173
          %s1175 = vtos %v1174
          %v1176 = vstv %s1175
          %v1177 = vsub.f32 %v796, %v1176
          %v1178 = vmul.f32 %v1177, 1.442695
          %v1179 = vpow.pop %v1178
          %v1180 = vsel %vm815, %v1179, 0.0
          %1181 = vadd.xlane.f32.xlu0 %v1180
          %v1182 = vpop.xlane.xlu0 %1181
          %v1183 = vrot.slane %v1182, 4
          %v1184 = vadd.f32 %v1182, %v1183
          %v1185 = vrot.slane %v1184, 2
          %v1186 = vadd.f32 %v1184, %v1185
          %v1187 = vrot.slane %v1186, 1
          %v1188 = vadd.f32 %v1186, %v1187
          %s1189 = vtos %v1188
          %v1190 = vperm.slane %v1179, 0
          %v1191 = vmul.f32 %v786, %v1190
          %v1192 = vmul.f32 %v788, %v1190
          %1193 = vadd.xlane.f32.xlu0 %v1191
          %v1194 = vpop.xlane.xlu0 %1193
          %1195 = vadd.xlane.f32.xlu0 %v1192
          %v1196 = vpop.xlane.xlu0 %1195
          %v1197 = vstv %s1189
          %v1198 = vrcp.pop %v1197
          %v1199 = vmul.f32 %v1197, %v1198
          %v1200 = vsub.f32 1.0, %v1199
          %v1201 = vmul.f32 %v1198, %v1200
          %v1202 = vadd.f32 %v1198, %v1201
          %vm1203 = vweird.f32 %v1197
          %vm1204 = vweird.f32 %v1198
          %vm1205 = vmor %vm1203, %vm1204
          %v1206 = vsel %vm1205, %v1198, %v1202
          %v1207 = vand.u32 2147483647, %v1197
          %vm1208 = vcmp.eq.f32.partialorder %v1207, 8.507059e+37
          %v1209 = vand.u32 %v1197, 2147483648
          %v1210 = vor.u32 1.1754944e-38, %v1209
          %v1211 = vsel %vm1208, %v1210, %v1206
          %v1212 = vmul.f32 %v1194, %v1211
          %v1213 = vmul.f32 %v1196, %v1211
          %v1214 = vmul.f32 %v806, %v1212
          %v1215 = vmul.f32 %v814, %v1213
          %v1216 = vpack.c.bf16 %v865, %v864
          %v1217 = vpack.c.bf16 %v915, %v914
          %v1218 = vpack.c.bf16 %v965, %v964
          %v1219 = vpack.c.bf16 %v1015, %v1014
          %v1220 = vpack.c.bf16 %v1065, %v1064
          %v1221 = vpack.c.bf16 %v1115, %v1114
          %v1222 = vpack.c.bf16 %v1165, %v1164
          %v1223 = vpack.c.bf16 %v1215, %v1214
          %v1226 = vunpack.c.l.b16 %v362
          %v1227 = vunpack.c.l.b16 %v363
          %v1228 = vpack.c.b16 %v1227, %v1226
          %v1230 = vsel %vm605, %v1228, 0
          %1232 = vmatpush.bf16.msra.mxu0 0
          %1233 = vmatpush.bf16.msra.mxu0 0
          %1234 = vmatpush.bf16.msra.mxu0 0
          %1235 = vmatpush.bf16.msra.mxu0 0
          %1236 = vmatpush.bf16.msra.mxu0 0
          %1237 = vmatpush.bf16.msra.mxu0 0
          %1238 = vmatpush.bf16.msra.mxu0 0
          %1239 = vmatpush.bf16.msra.mxu0 %v1216
          %1240 = vmatmul.bf16.gmra.mxu0 %v1230
          %v1241 = vpop.f32.mrf.mxu0
          %v1242 = vadd.f32 %v405, %v1241
          %v1243 = vpop.f32.mrf.mxu0
          %v1244 = vadd.f32 %v410, %v1243
          %1245 = vdwg.mxu0
          %1246 = vmatpush.bf16.msra.mxu0 0
          %1247 = vmatpush.bf16.msra.mxu0 0
          %1248 = vmatpush.bf16.msra.mxu0 0
          %1249 = vmatpush.bf16.msra.mxu0 0
          %1250 = vmatpush.bf16.msra.mxu0 0
          %1251 = vmatpush.bf16.msra.mxu0 0
          %1252 = vmatpush.bf16.msra.mxu0 0
          %1253 = vmatpush.bf16.msra.mxu0 %v1217
          %1254 = vmatmul.bf16.gmra.mxu0 %v1230
          %v1255 = vpop.f32.mrf.mxu0
          %v1256 = vadd.f32 %v405, %v1255
          %v1257 = vpop.f32.mrf.mxu0
          %v1258 = vadd.f32 %v410, %v1257
          %1259 = vdwg.mxu0
          %1260 = vmatpush.bf16.msra.mxu0 0
          %1261 = vmatpush.bf16.msra.mxu0 0
          %1262 = vmatpush.bf16.msra.mxu0 0
          %1263 = vmatpush.bf16.msra.mxu0 0
          %1264 = vmatpush.bf16.msra.mxu0 0
          %1265 = vmatpush.bf16.msra.mxu0 0
          %1266 = vmatpush.bf16.msra.mxu0 0
          %1267 = vmatpush.bf16.msra.mxu0 %v1218
          %1268 = vmatmul.bf16.gmra.mxu0 %v1230
          %v1269 = vpop.f32.mrf.mxu0
          %v1270 = vadd.f32 %v405, %v1269
          %v1271 = vpop.f32.mrf.mxu0
          %v1272 = vadd.f32 %v410, %v1271
          %1273 = vdwg.mxu0
          %1274 = vmatpush.bf16.msra.mxu0 0
          %1275 = vmatpush.bf16.msra.mxu0 0
          %1276 = vmatpush.bf16.msra.mxu0 0
          %1277 = vmatpush.bf16.msra.mxu0 0
          %1278 = vmatpush.bf16.msra.mxu0 0
          %1279 = vmatpush.bf16.msra.mxu0 0
          %1280 = vmatpush.bf16.msra.mxu0 0
          %1281 = vmatpush.bf16.msra.mxu0 %v1219
          %1282 = vmatmul.bf16.gmra.mxu0 %v1230
          %v1283 = vpop.f32.mrf.mxu0
          %v1284 = vadd.f32 %v405, %v1283
          %v1285 = vpop.f32.mrf.mxu0
          %v1286 = vadd.f32 %v410, %v1285
          %1287 = vdwg.mxu0
          %1288 = vmatpush.bf16.msra.mxu0 0
          %1289 = vmatpush.bf16.msra.mxu0 0
          %1290 = vmatpush.bf16.msra.mxu0 0
          %1291 = vmatpush.bf16.msra.mxu0 0
          %1292 = vmatpush.bf16.msra.mxu0 0
          %1293 = vmatpush.bf16.msra.mxu0 0
          %1294 = vmatpush.bf16.msra.mxu0 0
          %1295 = vmatpush.bf16.msra.mxu0 %v1220
          %1296 = vmatmul.bf16.gmra.mxu0 %v1230
          %v1297 = vpop.f32.mrf.mxu0
          %v1298 = vadd.f32 %v405, %v1297
          %v1299 = vpop.f32.mrf.mxu0
          %v1300 = vadd.f32 %v410, %v1299
          %1301 = vdwg.mxu0
          %1302 = vmatpush.bf16.msra.mxu0 0
          %1303 = vmatpush.bf16.msra.mxu0 0
          %1304 = vmatpush.bf16.msra.mxu0 0
          %1305 = vmatpush.bf16.msra.mxu0 0
          %1306 = vmatpush.bf16.msra.mxu0 0
          %1307 = vmatpush.bf16.msra.mxu0 0
          %1308 = vmatpush.bf16.msra.mxu0 0
          %1309 = vmatpush.bf16.msra.mxu0 %v1221
          %1310 = vmatmul.bf16.gmra.mxu0 %v1230
          %v1311 = vpop.f32.mrf.mxu0
          %v1312 = vadd.f32 %v405, %v1311
          %v1313 = vpop.f32.mrf.mxu0
          %v1314 = vadd.f32 %v410, %v1313
          %1315 = vdwg.mxu0
          %1316 = vmatpush.bf16.msra.mxu0 0
          %1317 = vmatpush.bf16.msra.mxu0 0
          %1318 = vmatpush.bf16.msra.mxu0 0
          %1319 = vmatpush.bf16.msra.mxu0 0
          %1320 = vmatpush.bf16.msra.mxu0 0
          %1321 = vmatpush.bf16.msra.mxu0 0
          %1322 = vmatpush.bf16.msra.mxu0 0
          %1323 = vmatpush.bf16.msra.mxu0 %v1222
          %1324 = vmatmul.bf16.gmra.mxu0 %v1230
          %v1325 = vpop.f32.mrf.mxu0
          %v1326 = vadd.f32 %v405, %v1325
          %v1327 = vpop.f32.mrf.mxu0
          %v1328 = vadd.f32 %v410, %v1327
          %1329 = vdwg.mxu0
          %1330 = vmatpush.bf16.msra.mxu0 0
          %1331 = vmatpush.bf16.msra.mxu0 0
          %1332 = vmatpush.bf16.msra.mxu0 0
          %1333 = vmatpush.bf16.msra.mxu0 0
          %1334 = vmatpush.bf16.msra.mxu0 0
          %1335 = vmatpush.bf16.msra.mxu0 0
          %1336 = vmatpush.bf16.msra.mxu0 0
          %1337 = vmatpush.bf16.msra.mxu0 %v1223
          %1338 = vmatmul.bf16.gmra.mxu0 %v1230
          %v1339 = vpop.f32.mrf.mxu0
          %v1340 = vadd.f32 %v405, %v1339
          %v1341 = vpop.f32.mrf.mxu0
          %v1342 = vadd.f32 %v410, %v1341
          %1343 = vdwg.mxu0
          %v1344 = vadd.f32 %v457, %v1242
          %v1345 = vadd.f32 %v458, %v1256
          %v1346 = vadd.f32 %v459, %v1270
          %v1347 = vadd.f32 %v460, %v1284
          %v1348 = vadd.f32 %v461, %v1298
          %v1349 = vadd.f32 %v462, %v1312
          %v1350 = vadd.f32 %v463, %v1326
          %v1351 = vadd.f32 %v464, %v1340
          %v1352 = vadd.f32 %v465, %v1244
          %v1353 = vadd.f32 %v466, %v1258
          %v1354 = vadd.f32 %v467, %v1272
          %v1355 = vadd.f32 %v468, %v1286
          %v1356 = vadd.f32 %v469, %v1300
          %v1357 = vadd.f32 %v470, %v1314
          %v1358 = vadd.f32 %v471, %v1328
          %v1359 = vadd.f32 %v472, %v1342
          %v1360 = vadd.f32 %v1344, %v1345
          %v1361 = vadd.f32 %v1360, %v1346
          %v1362 = vadd.f32 %v1361, %v1347
          %v1363 = vadd.f32 %v1362, %v1348
          %v1364 = vadd.f32 %v1363, %v1349
          %v1365 = vadd.f32 %v1364, %v1350
          %v1366 = vadd.f32 %v1365, %v1351
          %v1367 = vadd.f32 %v1366, %v1352
          %v1368 = vadd.f32 %v1367, %v1353
          %v1369 = vadd.f32 %v1368, %v1354
          %v1370 = vadd.f32 %v1369, %v1355
          %v1371 = vadd.f32 %v1370, %v1356
          %v1372 = vadd.f32 %v1371, %v1357
          %v1373 = vadd.f32 %v1372, %v1358
          %v1374 = vadd.f32 %v1373, %v1359
          %1375 = vadd.xlane.f32.xlu0 %v1374
          %v1376 = vpop.xlane.xlu0 %1375
          %v1377 = vrot.slane %v1376, 4
          %v1378 = vadd.f32 %v1376, %v1377
          %v1379 = vrot.slane %v1378, 2
          %v1380 = vadd.f32 %v1378, %v1379
          %v1381 = vrot.slane %v1380, 1
          %v1382 = vadd.f32 %v1380, %v1381
          %s1383 = vtos %v1382
          %v1384 = vstv %s1383
          %v1385 = vmul.f32 %v1384, 6.1035156e-05
          %v1386 = vsub.f32 %v1344, %v1385
          %v1387 = vsub.f32 %v1345, %v1385
          %v1388 = vsub.f32 %v1346, %v1385
          %v1389 = vsub.f32 %v1347, %v1385
          %v1390 = vsub.f32 %v1348, %v1385
          %v1391 = vsub.f32 %v1349, %v1385
          %v1392 = vsub.f32 %v1350, %v1385
          %v1393 = vsub.f32 %v1351, %v1385
          %v1394 = vsub.f32 %v1352, %v1385
          %v1395 = vsub.f32 %v1353, %v1385
          %v1396 = vsub.f32 %v1354, %v1385
          %v1397 = vsub.f32 %v1355, %v1385
          %v1398 = vsub.f32 %v1356, %v1385
          %v1399 = vsub.f32 %v1357, %v1385
          %v1400 = vsub.f32 %v1358, %v1385
          %v1401 = vsub.f32 %v1359, %v1385
          %v1402 = vmul.f32 %v1386, %v1386
          %v1403 = vmul.f32 %v1387, %v1387
          %v1404 = vmul.f32 %v1388, %v1388
          %v1405 = vmul.f32 %v1389, %v1389
          %v1406 = vmul.f32 %v1390, %v1390
          %v1407 = vmul.f32 %v1391, %v1391
          %v1408 = vmul.f32 %v1392, %v1392
          %v1409 = vmul.f32 %v1393, %v1393
          %v1410 = vmul.f32 %v1394, %v1394
          %v1411 = vmul.f32 %v1395, %v1395
          %v1412 = vmul.f32 %v1396, %v1396
          %v1413 = vmul.f32 %v1397, %v1397
          %v1414 = vmul.f32 %v1398, %v1398
          %v1415 = vmul.f32 %v1399, %v1399
          %v1416 = vmul.f32 %v1400, %v1400
          %v1417 = vmul.f32 %v1401, %v1401
          %v1418 = vadd.f32 %v1402, %v1403
          %v1419 = vadd.f32 %v1418, %v1404
          %v1420 = vadd.f32 %v1419, %v1405
          %v1421 = vadd.f32 %v1420, %v1406
          %v1422 = vadd.f32 %v1421, %v1407
          %v1423 = vadd.f32 %v1422, %v1408
          %v1424 = vadd.f32 %v1423, %v1409
          %v1425 = vadd.f32 %v1424, %v1410
          %v1426 = vadd.f32 %v1425, %v1411
          %v1427 = vadd.f32 %v1426, %v1412
          %v1428 = vadd.f32 %v1427, %v1413
          %v1429 = vadd.f32 %v1428, %v1414
          %v1430 = vadd.f32 %v1429, %v1415
          %v1431 = vadd.f32 %v1430, %v1416
          %v1432 = vadd.f32 %v1431, %v1417
          %1433 = vadd.xlane.f32.xlu0 %v1432
          %v1434 = vpop.xlane.xlu0 %1433
          %v1435 = vrot.slane %v1434, 4
          %v1436 = vadd.f32 %v1434, %v1435
          %v1437 = vrot.slane %v1436, 2
          %v1438 = vadd.f32 %v1436, %v1437
          %v1439 = vrot.slane %v1438, 1
          %v1440 = vadd.f32 %v1438, %v1439
          %s1441 = vtos %v1440
          %v1442 = vstv %s1441
          %v1443 = vmul.f32 %v1442, 6.1035156e-05
          %v1444 = vadd.f32 %v1443, 1e-05
          %v1445 = vrsqrt.pop %v1444
          %v1446 = vmul.f32 %v1445, %v1444
          %v1447 = vmul.f32 %v1446, %v1445
          %v1448 = vmul.f32 0.5, %v1447
          %v1449 = vsub.f32 1.5, %v1448
          %v1450 = vmul.f32 %v1445, %v1449
          %vm1451 = vweird.f32 %v1444
          %vm1452 = vweird.f32 %v1445
          %vm1453 = vmor %vm1451, %vm1452
          %v1454 = vsel %vm1453, %v1445, %v1450
          %v1455 = vmul.f32 %v1386, %v1454
          %v1456 = vmul.f32 %v1387, %v1454
          %v1457 = vmul.f32 %v1388, %v1454
          %v1458 = vmul.f32 %v1389, %v1454
          %v1459 = vmul.f32 %v1390, %v1454
          %v1460 = vmul.f32 %v1391, %v1454
          %v1461 = vmul.f32 %v1392, %v1454
          %v1462 = vmul.f32 %v1393, %v1454
          %v1463 = vmul.f32 %v1394, %v1454
          %v1464 = vmul.f32 %v1395, %v1454
          %v1465 = vmul.f32 %v1396, %v1454
          %v1466 = vmul.f32 %v1397, %v1454
          %v1467 = vmul.f32 %v1398, %v1454
          %v1468 = vmul.f32 %v1399, %v1454
          %v1469 = vmul.f32 %v1400, %v1454
          %v1470 = vmul.f32 %v1401, %v1454
          %v1471 = vpack.c.bf16 %v1463, %v1455
          %v1472 = vpack.c.bf16 %v1464, %v1456
          %v1473 = vpack.c.bf16 %v1465, %v1457
          %v1474 = vpack.c.bf16 %v1466, %v1458
          %v1475 = vpack.c.bf16 %v1467, %v1459
          %v1476 = vpack.c.bf16 %v1468, %v1460
          %v1477 = vpack.c.bf16 %v1469, %v1461
          %v1478 = vpack.c.bf16 %v1470, %v1462
          %v1483 = vunpack.c.l.b16 %v364
          %v1484 = vunpack.c.l.b16 %v365
          %v1485 = vunpack.c.l.b16 %v366
          %v1486 = vunpack.c.l.b16 %v367
          %v1487 = vpack.c.b16 %v1484, %v1483
          %v1488 = vpack.c.b16 %v1486, %v1485
          %v1490 = vsel %vm605, %v1487, 0
          %v1493 = vsel %vm605, %v1488, 0
          %1495 = vmatpush.bf16.msra.mxu0 0
          %1496 = vmatpush.bf16.msra.mxu0 0
          %1497 = vmatpush.bf16.msra.mxu0 0
          %1498 = vmatpush.bf16.msra.mxu0 0
          %1499 = vmatpush.bf16.msra.mxu0 0
          %1500 = vmatpush.bf16.msra.mxu0 0
          %1501 = vmatpush.bf16.msra.mxu0 0
          %1502 = vmatpush.bf16.msra.mxu0 %v1471
          %1503 = vmatmul.bf16.gmra.mxu0 %v1490
          %v1504 = vpop.f32.mrf.mxu0
          %v1505 = vadd.f32 %v419, %v1504
          %v1506 = vpop.f32.mrf.mxu0
          %v1507 = vadd.f32 %v424, %v1506
          %1508 = vmatmul.bf16.gmra.mxu0 %v1493
          %v1509 = vpop.f32.mrf.mxu0
          %v1510 = vadd.f32 %v429, %v1509
          %v1511 = vpop.f32.mrf.mxu0
          %v1512 = vadd.f32 %v434, %v1511
          %1513 = vdwg.mxu0
          %1514 = vmatpush.bf16.msra.mxu0 0
          %1515 = vmatpush.bf16.msra.mxu0 0
          %1516 = vmatpush.bf16.msra.mxu0 0
          %1517 = vmatpush.bf16.msra.mxu0 0
          %1518 = vmatpush.bf16.msra.mxu0 0
          %1519 = vmatpush.bf16.msra.mxu0 0
          %1520 = vmatpush.bf16.msra.mxu0 0
          %1521 = vmatpush.bf16.msra.mxu0 %v1472
          %1522 = vmatmul.bf16.gmra.mxu0 %v1490
          %v1523 = vpop.f32.mrf.mxu0
          %v1524 = vadd.f32 %v419, %v1523
          %v1525 = vpop.f32.mrf.mxu0
          %v1526 = vadd.f32 %v424, %v1525
          %1527 = vmatmul.bf16.gmra.mxu0 %v1493
          %v1528 = vpop.f32.mrf.mxu0
          %v1529 = vadd.f32 %v429, %v1528
          %v1530 = vpop.f32.mrf.mxu0
          %v1531 = vadd.f32 %v434, %v1530
          %1532 = vdwg.mxu0
          %1533 = vmatpush.bf16.msra.mxu0 0
          %1534 = vmatpush.bf16.msra.mxu0 0
          %1535 = vmatpush.bf16.msra.mxu0 0
          %1536 = vmatpush.bf16.msra.mxu0 0
          %1537 = vmatpush.bf16.msra.mxu0 0
          %1538 = vmatpush.bf16.msra.mxu0 0
          %1539 = vmatpush.bf16.msra.mxu0 0
          %1540 = vmatpush.bf16.msra.mxu0 %v1473
          %1541 = vmatmul.bf16.gmra.mxu0 %v1490
          %v1542 = vpop.f32.mrf.mxu0
          %v1543 = vadd.f32 %v419, %v1542
          %v1544 = vpop.f32.mrf.mxu0
          %v1545 = vadd.f32 %v424, %v1544
          %1546 = vmatmul.bf16.gmra.mxu0 %v1493
          %v1547 = vpop.f32.mrf.mxu0
          %v1548 = vadd.f32 %v429, %v1547
          %v1549 = vpop.f32.mrf.mxu0
          %v1550 = vadd.f32 %v434, %v1549
          %1551 = vdwg.mxu0
          %1552 = vmatpush.bf16.msra.mxu0 0
          %1553 = vmatpush.bf16.msra.mxu0 0
          %1554 = vmatpush.bf16.msra.mxu0 0
          %1555 = vmatpush.bf16.msra.mxu0 0
          %1556 = vmatpush.bf16.msra.mxu0 0
          %1557 = vmatpush.bf16.msra.mxu0 0
          %1558 = vmatpush.bf16.msra.mxu0 0
          %1559 = vmatpush.bf16.msra.mxu0 %v1474
          %1560 = vmatmul.bf16.gmra.mxu0 %v1490
          %v1561 = vpop.f32.mrf.mxu0
          %v1562 = vadd.f32 %v419, %v1561
          %v1563 = vpop.f32.mrf.mxu0
          %v1564 = vadd.f32 %v424, %v1563
          %1565 = vmatmul.bf16.gmra.mxu0 %v1493
          %v1566 = vpop.f32.mrf.mxu0
          %v1567 = vadd.f32 %v429, %v1566
          %v1568 = vpop.f32.mrf.mxu0
          %v1569 = vadd.f32 %v434, %v1568
          %1570 = vdwg.mxu0
          %1571 = vmatpush.bf16.msra.mxu0 0
          %1572 = vmatpush.bf16.msra.mxu0 0
          %1573 = vmatpush.bf16.msra.mxu0 0
          %1574 = vmatpush.bf16.msra.mxu0 0
          %1575 = vmatpush.bf16.msra.mxu0 0
          %1576 = vmatpush.bf16.msra.mxu0 0
          %1577 = vmatpush.bf16.msra.mxu0 0
          %1578 = vmatpush.bf16.msra.mxu0 %v1475
          %1579 = vmatmul.bf16.gmra.mxu0 %v1490
          %v1580 = vpop.f32.mrf.mxu0
          %v1581 = vadd.f32 %v419, %v1580
          %v1582 = vpop.f32.mrf.mxu0
          %v1583 = vadd.f32 %v424, %v1582
          %1584 = vmatmul.bf16.gmra.mxu0 %v1493
          %v1585 = vpop.f32.mrf.mxu0
          %v1586 = vadd.f32 %v429, %v1585
          %v1587 = vpop.f32.mrf.mxu0
          %v1588 = vadd.f32 %v434, %v1587
          %1589 = vdwg.mxu0
          %1590 = vmatpush.bf16.msra.mxu0 0
          %1591 = vmatpush.bf16.msra.mxu0 0
          %1592 = vmatpush.bf16.msra.mxu0 0
          %1593 = vmatpush.bf16.msra.mxu0 0
          %1594 = vmatpush.bf16.msra.mxu0 0
          %1595 = vmatpush.bf16.msra.mxu0 0
          %1596 = vmatpush.bf16.msra.mxu0 0
          %1597 = vmatpush.bf16.msra.mxu0 %v1476
          %1598 = vmatmul.bf16.gmra.mxu0 %v1490
          %v1599 = vpop.f32.mrf.mxu0
          %v1600 = vadd.f32 %v419, %v1599
          %v1601 = vpop.f32.mrf.mxu0
          %v1602 = vadd.f32 %v424, %v1601
          %1603 = vmatmul.bf16.gmra.mxu0 %v1493
          %v1604 = vpop.f32.mrf.mxu0
          %v1605 = vadd.f32 %v429, %v1604
          %v1606 = vpop.f32.mrf.mxu0
          %v1607 = vadd.f32 %v434, %v1606
          %1608 = vdwg.mxu0
          %1609 = vmatpush.bf16.msra.mxu0 0
          %1610 = vmatpush.bf16.msra.mxu0 0
          %1611 = vmatpush.bf16.msra.mxu0 0
          %1612 = vmatpush.bf16.msra.mxu0 0
          %1613 = vmatpush.bf16.msra.mxu0 0
          %1614 = vmatpush.bf16.msra.mxu0 0
          %1615 = vmatpush.bf16.msra.mxu0 0
          %1616 = vmatpush.bf16.msra.mxu0 %v1477
          %1617 = vmatmul.bf16.gmra.mxu0 %v1490
          %v1618 = vpop.f32.mrf.mxu0
          %v1619 = vadd.f32 %v419, %v1618
          %v1620 = vpop.f32.mrf.mxu0
          %v1621 = vadd.f32 %v424, %v1620
          %1622 = vmatmul.bf16.gmra.mxu0 %v1493
          %v1623 = vpop.f32.mrf.mxu0
          %v1624 = vadd.f32 %v429, %v1623
          %v1625 = vpop.f32.mrf.mxu0
          %v1626 = vadd.f32 %v434, %v1625
          %1627 = vdwg.mxu0
          %1628 = vmatpush.bf16.msra.mxu0 0
          %1629 = vmatpush.bf16.msra.mxu0 0
          %1630 = vmatpush.bf16.msra.mxu0 0
          %1631 = vmatpush.bf16.msra.mxu0 0
          %1632 = vmatpush.bf16.msra.mxu0 0
          %1633 = vmatpush.bf16.msra.mxu0 0
          %1634 = vmatpush.bf16.msra.mxu0 0
          %1635 = vmatpush.bf16.msra.mxu0 %v1478
          %1636 = vmatmul.bf16.gmra.mxu0 %v1490
          %v1637 = vpop.f32.mrf.mxu0
          %v1638 = vadd.f32 %v419, %v1637
          %v1639 = vpop.f32.mrf.mxu0
          %v1640 = vadd.f32 %v424, %v1639
          %1641 = vmatmul.bf16.gmra.mxu0 %v1493
          %v1642 = vpop.f32.mrf.mxu0
          %v1643 = vadd.f32 %v429, %v1642
          %v1644 = vpop.f32.mrf.mxu0
          %v1645 = vadd.f32 %v434, %v1644
          %1646 = vdwg.mxu0
          %v1647 = vxor.u32 %v1505, 2147483648
          %v1648 = vxor.u32 %v1524, 2147483648
          %v1649 = vxor.u32 %v1543, 2147483648
          %v1650 = vxor.u32 %v1562, 2147483648
          %v1651 = vxor.u32 %v1581, 2147483648
          %v1652 = vxor.u32 %v1600, 2147483648
          %v1653 = vxor.u32 %v1619, 2147483648
          %v1654 = vxor.u32 %v1638, 2147483648
          %v1655 = vxor.u32 %v1507, 2147483648
          %v1656 = vxor.u32 %v1526, 2147483648
          %v1657 = vxor.u32 %v1545, 2147483648
          %v1658 = vxor.u32 %v1564, 2147483648
          %v1659 = vxor.u32 %v1583, 2147483648
          %v1660 = vxor.u32 %v1602, 2147483648
          %v1661 = vxor.u32 %v1621, 2147483648
          %v1662 = vxor.u32 %v1640, 2147483648
          %v1663 = vxor.u32 %v1510, 2147483648
          %v1664 = vxor.u32 %v1529, 2147483648
          %v1665 = vxor.u32 %v1548, 2147483648
          %v1666 = vxor.u32 %v1567, 2147483648
          %v1667 = vxor.u32 %v1586, 2147483648
          %v1668 = vxor.u32 %v1605, 2147483648
          %v1669 = vxor.u32 %v1624, 2147483648
          %v1670 = vxor.u32 %v1643, 2147483648
          %v1671 = vxor.u32 %v1512, 2147483648
          %v1672 = vxor.u32 %v1531, 2147483648
          %v1673 = vxor.u32 %v1550, 2147483648
          %v1674 = vxor.u32 %v1569, 2147483648
          %v1675 = vxor.u32 %v1588, 2147483648
          %v1676 = vxor.u32 %v1607, 2147483648
          %v1677 = vxor.u32 %v1626, 2147483648
          %v1678 = vxor.u32 %v1645, 2147483648
          %v1679 = vmul.f32 %v1647, 1.442695
          %v1680 = vpow.pop %v1679
          %v1681 = vmul.f32 %v1648, 1.442695
          %v1682 = vpow.pop %v1681
          %v1683 = vmul.f32 %v1649, 1.442695
          %v1684 = vpow.pop %v1683
          %v1685 = vmul.f32 %v1650, 1.442695
          %v1686 = vpow.pop %v1685
          %v1687 = vmul.f32 %v1651, 1.442695
          %v1688 = vpow.pop %v1687
          %v1689 = vmul.f32 %v1652, 1.442695
          %v1690 = vpow.pop %v1689
          %v1691 = vmul.f32 %v1653, 1.442695
          %v1692 = vpow.pop %v1691
          %v1693 = vmul.f32 %v1654, 1.442695
          %v1694 = vpow.pop %v1693
          %v1695 = vmul.f32 %v1655, 1.442695
          %v1696 = vpow.pop %v1695
          %v1697 = vmul.f32 %v1656, 1.442695
          %v1698 = vpow.pop %v1697
          %v1699 = vmul.f32 %v1657, 1.442695
          %v1700 = vpow.pop %v1699
          %v1701 = vmul.f32 %v1658, 1.442695
          %v1702 = vpow.pop %v1701
          %v1703 = vmul.f32 %v1659, 1.442695
          %v1704 = vpow.pop %v1703
          %v1705 = vmul.f32 %v1660, 1.442695
          %v1706 = vpow.pop %v1705
          %v1707 = vmul.f32 %v1661, 1.442695
          %v1708 = vpow.pop %v1707
          %v1709 = vmul.f32 %v1662, 1.442695
          %v1710 = vpow.pop %v1709
          %v1711 = vmul.f32 %v1663, 1.442695
          %v1712 = vpow.pop %v1711
          %v1713 = vmul.f32 %v1664, 1.442695
          %v1714 = vpow.pop %v1713
          %v1715 = vmul.f32 %v1665, 1.442695
          %v1716 = vpow.pop %v1715
          %v1717 = vmul.f32 %v1666, 1.442695
          %v1718 = vpow.pop %v1717
          %v1719 = vmul.f32 %v1667, 1.442695
          %v1720 = vpow.pop %v1719
          %v1721 = vmul.f32 %v1668, 1.442695
          %v1722 = vpow.pop %v1721
          %v1723 = vmul.f32 %v1669, 1.442695
          %v1724 = vpow.pop %v1723
          %v1725 = vmul.f32 %v1670, 1.442695
          %v1726 = vpow.pop %v1725
          %v1727 = vmul.f32 %v1671, 1.442695
          %v1728 = vpow.pop %v1727
          %v1729 = vmul.f32 %v1672, 1.442695
          %v1730 = vpow.pop %v1729
          %v1731 = vmul.f32 %v1673, 1.442695
          %v1732 = vpow.pop %v1731
          %v1733 = vmul.f32 %v1674, 1.442695
          %v1734 = vpow.pop %v1733
          %v1735 = vmul.f32 %v1675, 1.442695
          %v1736 = vpow.pop %v1735
          %v1737 = vmul.f32 %v1676, 1.442695
          %v1738 = vpow.pop %v1737
          %v1739 = vmul.f32 %v1677, 1.442695
          %v1740 = vpow.pop %v1739
          %v1741 = vmul.f32 %v1678, 1.442695
          %v1742 = vpow.pop %v1741
          %v1743 = vadd.f32 %v1680, 1.0
          %v1744 = vadd.f32 %v1682, 1.0
          %v1745 = vadd.f32 %v1684, 1.0
          %v1746 = vadd.f32 %v1686, 1.0
          %v1747 = vadd.f32 %v1688, 1.0
          %v1748 = vadd.f32 %v1690, 1.0
          %v1749 = vadd.f32 %v1692, 1.0
          %v1750 = vadd.f32 %v1694, 1.0
          %v1751 = vadd.f32 %v1696, 1.0
          %v1752 = vadd.f32 %v1698, 1.0
          %v1753 = vadd.f32 %v1700, 1.0
          %v1754 = vadd.f32 %v1702, 1.0
          %v1755 = vadd.f32 %v1704, 1.0
          %v1756 = vadd.f32 %v1706, 1.0
          %v1757 = vadd.f32 %v1708, 1.0
          %v1758 = vadd.f32 %v1710, 1.0
          %v1759 = vadd.f32 %v1712, 1.0
          %v1760 = vadd.f32 %v1714, 1.0
          %v1761 = vadd.f32 %v1716, 1.0
          %v1762 = vadd.f32 %v1718, 1.0
          %v1763 = vadd.f32 %v1720, 1.0
          %v1764 = vadd.f32 %v1722, 1.0
          %v1765 = vadd.f32 %v1724, 1.0
          %v1766 = vadd.f32 %v1726, 1.0
          %v1767 = vadd.f32 %v1728, 1.0
          %v1768 = vadd.f32 %v1730, 1.0
          %v1769 = vadd.f32 %v1732, 1.0
          %v1770 = vadd.f32 %v1734, 1.0
          %v1771 = vadd.f32 %v1736, 1.0
          %v1772 = vadd.f32 %v1738, 1.0
          %v1773 = vadd.f32 %v1740, 1.0
          %v1774 = vadd.f32 %v1742, 1.0
          %v1775 = vrcp.pop %v1743
          %v1776 = vmul.f32 %v1743, %v1775
          %v1777 = vsub.f32 1.0, %v1776
          %v1778 = vmul.f32 %v1775, %v1777
          %v1779 = vadd.f32 %v1775, %v1778
          %vm1780 = vweird.f32 %v1743
          %vm1781 = vweird.f32 %v1775
          %vm1782 = vmor %vm1780, %vm1781
          %v1783 = vsel %vm1782, %v1775, %v1779
          %v1784 = vand.u32 2147483647, %v1743
          %vm1785 = vcmp.eq.f32.partialorder %v1784, 8.507059e+37
          %v1786 = vand.u32 %v1743, 2147483648
          %v1787 = vor.u32 1.1754944e-38, %v1786
          %v1788 = vsel %vm1785, %v1787, %v1783
          %v1789 = vmul.f32 1.0, %v1788
          %v1790 = vrcp.pop %v1744
          %v1791 = vmul.f32 %v1744, %v1790
          %v1792 = vsub.f32 1.0, %v1791
          %v1793 = vmul.f32 %v1790, %v1792
          %v1794 = vadd.f32 %v1790, %v1793
          %vm1795 = vweird.f32 %v1744
          %vm1796 = vweird.f32 %v1790
          %vm1797 = vmor %vm1795, %vm1796
          %v1798 = vsel %vm1797, %v1790, %v1794
          %v1799 = vand.u32 2147483647, %v1744
          %vm1800 = vcmp.eq.f32.partialorder %v1799, 8.507059e+37
          %v1801 = vand.u32 %v1744, 2147483648
          %v1802 = vor.u32 1.1754944e-38, %v1801
          %v1803 = vsel %vm1800, %v1802, %v1798
          %v1804 = vmul.f32 1.0, %v1803
          %v1805 = vrcp.pop %v1745
          %v1806 = vmul.f32 %v1745, %v1805
          %v1807 = vsub.f32 1.0, %v1806
          %v1808 = vmul.f32 %v1805, %v1807
          %v1809 = vadd.f32 %v1805, %v1808
          %vm1810 = vweird.f32 %v1745
          %vm1811 = vweird.f32 %v1805
          %vm1812 = vmor %vm1810, %vm1811
          %v1813 = vsel %vm1812, %v1805, %v1809
          %v1814 = vand.u32 2147483647, %v1745
          %vm1815 = vcmp.eq.f32.partialorder %v1814, 8.507059e+37
          %v1816 = vand.u32 %v1745, 2147483648
          %v1817 = vor.u32 1.1754944e-38, %v1816
          %v1818 = vsel %vm1815, %v1817, %v1813
          %v1819 = vmul.f32 1.0, %v1818
          %v1820 = vrcp.pop %v1746
          %v1821 = vmul.f32 %v1746, %v1820
          %v1822 = vsub.f32 1.0, %v1821
          %v1823 = vmul.f32 %v1820, %v1822
          %v1824 = vadd.f32 %v1820, %v1823
          %vm1825 = vweird.f32 %v1746
          %vm1826 = vweird.f32 %v1820
          %vm1827 = vmor %vm1825, %vm1826
          %v1828 = vsel %vm1827, %v1820, %v1824
          %v1829 = vand.u32 2147483647, %v1746
          %vm1830 = vcmp.eq.f32.partialorder %v1829, 8.507059e+37
          %v1831 = vand.u32 %v1746, 2147483648
          %v1832 = vor.u32 1.1754944e-38, %v1831
          %v1833 = vsel %vm1830, %v1832, %v1828
          %v1834 = vmul.f32 1.0, %v1833
          %v1835 = vrcp.pop %v1747
          %v1836 = vmul.f32 %v1747, %v1835
          %v1837 = vsub.f32 1.0, %v1836
          %v1838 = vmul.f32 %v1835, %v1837
          %v1839 = vadd.f32 %v1835, %v1838
          %vm1840 = vweird.f32 %v1747
          %vm1841 = vweird.f32 %v1835
          %vm1842 = vmor %vm1840, %vm1841
          %v1843 = vsel %vm1842, %v1835, %v1839
          %v1844 = vand.u32 2147483647, %v1747
          %vm1845 = vcmp.eq.f32.partialorder %v1844, 8.507059e+37
          %v1846 = vand.u32 %v1747, 2147483648
          %v1847 = vor.u32 1.1754944e-38, %v1846
          %v1848 = vsel %vm1845, %v1847, %v1843
          %v1849 = vmul.f32 1.0, %v1848
          %v1850 = vrcp.pop %v1748
          %v1851 = vmul.f32 %v1748, %v1850
          %v1852 = vsub.f32 1.0, %v1851
          %v1853 = vmul.f32 %v1850, %v1852
          %v1854 = vadd.f32 %v1850, %v1853
          %vm1855 = vweird.f32 %v1748
          %vm1856 = vweird.f32 %v1850
          %vm1857 = vmor %vm1855, %vm1856
          %v1858 = vsel %vm1857, %v1850, %v1854
          %v1859 = vand.u32 2147483647, %v1748
          %vm1860 = vcmp.eq.f32.partialorder %v1859, 8.507059e+37
          %v1861 = vand.u32 %v1748, 2147483648
          %v1862 = vor.u32 1.1754944e-38, %v1861
          %v1863 = vsel %vm1860, %v1862, %v1858
          %v1864 = vmul.f32 1.0, %v1863
          %v1865 = vrcp.pop %v1749
          %v1866 = vmul.f32 %v1749, %v1865
          %v1867 = vsub.f32 1.0, %v1866
          %v1868 = vmul.f32 %v1865, %v1867
          %v1869 = vadd.f32 %v1865, %v1868
          %vm1870 = vweird.f32 %v1749
          %vm1871 = vweird.f32 %v1865
          %vm1872 = vmor %vm1870, %vm1871
          %v1873 = vsel %vm1872, %v1865, %v1869
          %v1874 = vand.u32 2147483647, %v1749
          %vm1875 = vcmp.eq.f32.partialorder %v1874, 8.507059e+37
          %v1876 = vand.u32 %v1749, 2147483648
          %v1877 = vor.u32 1.1754944e-38, %v1876
          %v1878 = vsel %vm1875, %v1877, %v1873
          %v1879 = vmul.f32 1.0, %v1878
          %v1880 = vrcp.pop %v1750
          %v1881 = vmul.f32 %v1750, %v1880
          %v1882 = vsub.f32 1.0, %v1881
          %v1883 = vmul.f32 %v1880, %v1882
          %v1884 = vadd.f32 %v1880, %v1883
          %vm1885 = vweird.f32 %v1750
          %vm1886 = vweird.f32 %v1880
          %vm1887 = vmor %vm1885, %vm1886
          %v1888 = vsel %vm1887, %v1880, %v1884
          %v1889 = vand.u32 2147483647, %v1750
          %vm1890 = vcmp.eq.f32.partialorder %v1889, 8.507059e+37
          %v1891 = vand.u32 %v1750, 2147483648
          %v1892 = vor.u32 1.1754944e-38, %v1891
          %v1893 = vsel %vm1890, %v1892, %v1888
          %v1894 = vmul.f32 1.0, %v1893
          %v1895 = vrcp.pop %v1751
          %v1896 = vmul.f32 %v1751, %v1895
          %v1897 = vsub.f32 1.0, %v1896
          %v1898 = vmul.f32 %v1895, %v1897
          %v1899 = vadd.f32 %v1895, %v1898
          %vm1900 = vweird.f32 %v1751
          %vm1901 = vweird.f32 %v1895
          %vm1902 = vmor %vm1900, %vm1901
          %v1903 = vsel %vm1902, %v1895, %v1899
          %v1904 = vand.u32 2147483647, %v1751
          %vm1905 = vcmp.eq.f32.partialorder %v1904, 8.507059e+37
          %v1906 = vand.u32 %v1751, 2147483648
          %v1907 = vor.u32 1.1754944e-38, %v1906
          %v1908 = vsel %vm1905, %v1907, %v1903
          %v1909 = vmul.f32 1.0, %v1908
          %v1910 = vrcp.pop %v1752
          %v1911 = vmul.f32 %v1752, %v1910
          %v1912 = vsub.f32 1.0, %v1911
          %v1913 = vmul.f32 %v1910, %v1912
          %v1914 = vadd.f32 %v1910, %v1913
          %vm1915 = vweird.f32 %v1752
          %vm1916 = vweird.f32 %v1910
          %vm1917 = vmor %vm1915, %vm1916
          %v1918 = vsel %vm1917, %v1910, %v1914
          %v1919 = vand.u32 2147483647, %v1752
          %vm1920 = vcmp.eq.f32.partialorder %v1919, 8.507059e+37
          %v1921 = vand.u32 %v1752, 2147483648
          %v1922 = vor.u32 1.1754944e-38, %v1921
          %v1923 = vsel %vm1920, %v1922, %v1918
          %v1924 = vmul.f32 1.0, %v1923
          %v1925 = vrcp.pop %v1753
          %v1926 = vmul.f32 %v1753, %v1925
          %v1927 = vsub.f32 1.0, %v1926
          %v1928 = vmul.f32 %v1925, %v1927
          %v1929 = vadd.f32 %v1925, %v1928
          %vm1930 = vweird.f32 %v1753
          %vm1931 = vweird.f32 %v1925
          %vm1932 = vmor %vm1930, %vm1931
          %v1933 = vsel %vm1932, %v1925, %v1929
          %v1934 = vand.u32 2147483647, %v1753
          %vm1935 = vcmp.eq.f32.partialorder %v1934, 8.507059e+37
          %v1936 = vand.u32 %v1753, 2147483648
          %v1937 = vor.u32 1.1754944e-38, %v1936
          %v1938 = vsel %vm1935, %v1937, %v1933
          %v1939 = vmul.f32 1.0, %v1938
          %v1940 = vrcp.pop %v1754
          %v1941 = vmul.f32 %v1754, %v1940
          %v1942 = vsub.f32 1.0, %v1941
          %v1943 = vmul.f32 %v1940, %v1942
          %v1944 = vadd.f32 %v1940, %v1943
          %vm1945 = vweird.f32 %v1754
          %vm1946 = vweird.f32 %v1940
          %vm1947 = vmor %vm1945, %vm1946
          %v1948 = vsel %vm1947, %v1940, %v1944
          %v1949 = vand.u32 2147483647, %v1754
          %vm1950 = vcmp.eq.f32.partialorder %v1949, 8.507059e+37
          %v1951 = vand.u32 %v1754, 2147483648
          %v1952 = vor.u32 1.1754944e-38, %v1951
          %v1953 = vsel %vm1950, %v1952, %v1948
          %v1954 = vmul.f32 1.0, %v1953
          %v1955 = vrcp.pop %v1755
          %v1956 = vmul.f32 %v1755, %v1955
          %v1957 = vsub.f32 1.0, %v1956
          %v1958 = vmul.f32 %v1955, %v1957
          %v1959 = vadd.f32 %v1955, %v1958
          %vm1960 = vweird.f32 %v1755
          %vm1961 = vweird.f32 %v1955
          %vm1962 = vmor %vm1960, %vm1961
          %v1963 = vsel %vm1962, %v1955, %v1959
          %v1964 = vand.u32 2147483647, %v1755
          %vm1965 = vcmp.eq.f32.partialorder %v1964, 8.507059e+37
          %v1966 = vand.u32 %v1755, 2147483648
          %v1967 = vor.u32 1.1754944e-38, %v1966
          %v1968 = vsel %vm1965, %v1967, %v1963
          %v1969 = vmul.f32 1.0, %v1968
          %v1970 = vrcp.pop %v1756
          %v1971 = vmul.f32 %v1756, %v1970
          %v1972 = vsub.f32 1.0, %v1971
          %v1973 = vmul.f32 %v1970, %v1972
          %v1974 = vadd.f32 %v1970, %v1973
          %vm1975 = vweird.f32 %v1756
          %vm1976 = vweird.f32 %v1970
          %vm1977 = vmor %vm1975, %vm1976
          %v1978 = vsel %vm1977, %v1970, %v1974
          %v1979 = vand.u32 2147483647, %v1756
          %vm1980 = vcmp.eq.f32.partialorder %v1979, 8.507059e+37
          %v1981 = vand.u32 %v1756, 2147483648
          %v1982 = vor.u32 1.1754944e-38, %v1981
          %v1983 = vsel %vm1980, %v1982, %v1978
          %v1984 = vmul.f32 1.0, %v1983
          %v1985 = vrcp.pop %v1757
          %v1986 = vmul.f32 %v1757, %v1985
          %v1987 = vsub.f32 1.0, %v1986
          %v1988 = vmul.f32 %v1985, %v1987
          %v1989 = vadd.f32 %v1985, %v1988
          %vm1990 = vweird.f32 %v1757
          %vm1991 = vweird.f32 %v1985
          %vm1992 = vmor %vm1990, %vm1991
          %v1993 = vsel %vm1992, %v1985, %v1989
          %v1994 = vand.u32 2147483647, %v1757
          %vm1995 = vcmp.eq.f32.partialorder %v1994, 8.507059e+37
          %v1996 = vand.u32 %v1757, 2147483648
          %v1997 = vor.u32 1.1754944e-38, %v1996
          %v1998 = vsel %vm1995, %v1997, %v1993
          %v1999 = vmul.f32 1.0, %v1998
          %v2000 = vrcp.pop %v1758
          %v2001 = vmul.f32 %v1758, %v2000
          %v2002 = vsub.f32 1.0, %v2001
          %v2003 = vmul.f32 %v2000, %v2002
          %v2004 = vadd.f32 %v2000, %v2003
          %vm2005 = vweird.f32 %v1758
          %vm2006 = vweird.f32 %v2000
          %vm2007 = vmor %vm2005, %vm2006
          %v2008 = vsel %vm2007, %v2000, %v2004
          %v2009 = vand.u32 2147483647, %v1758
          %vm2010 = vcmp.eq.f32.partialorder %v2009, 8.507059e+37
          %v2011 = vand.u32 %v1758, 2147483648
          %v2012 = vor.u32 1.1754944e-38, %v2011
          %v2013 = vsel %vm2010, %v2012, %v2008
          %v2014 = vmul.f32 1.0, %v2013
          %v2015 = vrcp.pop %v1759
          %v2016 = vmul.f32 %v1759, %v2015
          %v2017 = vsub.f32 1.0, %v2016
          %v2018 = vmul.f32 %v2015, %v2017
          %v2019 = vadd.f32 %v2015, %v2018
          %vm2020 = vweird.f32 %v1759
          %vm2021 = vweird.f32 %v2015
          %vm2022 = vmor %vm2020, %vm2021
          %v2023 = vsel %vm2022, %v2015, %v2019
          %v2024 = vand.u32 2147483647, %v1759
          %vm2025 = vcmp.eq.f32.partialorder %v2024, 8.507059e+37
          %v2026 = vand.u32 %v1759, 2147483648
          %v2027 = vor.u32 1.1754944e-38, %v2026
          %v2028 = vsel %vm2025, %v2027, %v2023
          %v2029 = vmul.f32 1.0, %v2028
          %v2030 = vrcp.pop %v1760
          %v2031 = vmul.f32 %v1760, %v2030
          %v2032 = vsub.f32 1.0, %v2031
          %v2033 = vmul.f32 %v2030, %v2032
          %v2034 = vadd.f32 %v2030, %v2033
          %vm2035 = vweird.f32 %v1760
          %vm2036 = vweird.f32 %v2030
          %vm2037 = vmor %vm2035, %vm2036
          %v2038 = vsel %vm2037, %v2030, %v2034
          %v2039 = vand.u32 2147483647, %v1760
          %vm2040 = vcmp.eq.f32.partialorder %v2039, 8.507059e+37
          %v2041 = vand.u32 %v1760, 2147483648
          %v2042 = vor.u32 1.1754944e-38, %v2041
          %v2043 = vsel %vm2040, %v2042, %v2038
          %v2044 = vmul.f32 1.0, %v2043
          %v2045 = vrcp.pop %v1761
          %v2046 = vmul.f32 %v1761, %v2045
          %v2047 = vsub.f32 1.0, %v2046
          %v2048 = vmul.f32 %v2045, %v2047
          %v2049 = vadd.f32 %v2045, %v2048
          %vm2050 = vweird.f32 %v1761
          %vm2051 = vweird.f32 %v2045
          %vm2052 = vmor %vm2050, %vm2051
          %v2053 = vsel %vm2052, %v2045, %v2049
          %v2054 = vand.u32 2147483647, %v1761
          %vm2055 = vcmp.eq.f32.partialorder %v2054, 8.507059e+37
          %v2056 = vand.u32 %v1761, 2147483648
          %v2057 = vor.u32 1.1754944e-38, %v2056
          %v2058 = vsel %vm2055, %v2057, %v2053
          %v2059 = vmul.f32 1.0, %v2058
          %v2060 = vrcp.pop %v1762
          %v2061 = vmul.f32 %v1762, %v2060
          %v2062 = vsub.f32 1.0, %v2061
          %v2063 = vmul.f32 %v2060, %v2062
          %v2064 = vadd.f32 %v2060, %v2063
          %vm2065 = vweird.f32 %v1762
          %vm2066 = vweird.f32 %v2060
          %vm2067 = vmor %vm2065, %vm2066
          %v2068 = vsel %vm2067, %v2060, %v2064
          %v2069 = vand.u32 2147483647, %v1762
          %vm2070 = vcmp.eq.f32.partialorder %v2069, 8.507059e+37
          %v2071 = vand.u32 %v1762, 2147483648
          %v2072 = vor.u32 1.1754944e-38, %v2071
          %v2073 = vsel %vm2070, %v2072, %v2068
          %v2074 = vmul.f32 1.0, %v2073
          %v2075 = vrcp.pop %v1763
          %v2076 = vmul.f32 %v1763, %v2075
          %v2077 = vsub.f32 1.0, %v2076
          %v2078 = vmul.f32 %v2075, %v2077
          %v2079 = vadd.f32 %v2075, %v2078
          %vm2080 = vweird.f32 %v1763
          %vm2081 = vweird.f32 %v2075
          %vm2082 = vmor %vm2080, %vm2081
          %v2083 = vsel %vm2082, %v2075, %v2079
          %v2084 = vand.u32 2147483647, %v1763
          %vm2085 = vcmp.eq.f32.partialorder %v2084, 8.507059e+37
          %v2086 = vand.u32 %v1763, 2147483648
          %v2087 = vor.u32 1.1754944e-38, %v2086
          %v2088 = vsel %vm2085, %v2087, %v2083
          %v2089 = vmul.f32 1.0, %v2088
          %v2090 = vrcp.pop %v1764
          %v2091 = vmul.f32 %v1764, %v2090
          %v2092 = vsub.f32 1.0, %v2091
          %v2093 = vmul.f32 %v2090, %v2092
          %v2094 = vadd.f32 %v2090, %v2093
          %vm2095 = vweird.f32 %v1764
          %vm2096 = vweird.f32 %v2090
          %vm2097 = vmor %vm2095, %vm2096
          %v2098 = vsel %vm2097, %v2090, %v2094
          %v2099 = vand.u32 2147483647, %v1764
          %vm2100 = vcmp.eq.f32.partialorder %v2099, 8.507059e+37
          %v2101 = vand.u32 %v1764, 2147483648
          %v2102 = vor.u32 1.1754944e-38, %v2101
          %v2103 = vsel %vm2100, %v2102, %v2098
          %v2104 = vmul.f32 1.0, %v2103
          %v2105 = vrcp.pop %v1765
          %v2106 = vmul.f32 %v1765, %v2105
          %v2107 = vsub.f32 1.0, %v2106
          %v2108 = vmul.f32 %v2105, %v2107
          %v2109 = vadd.f32 %v2105, %v2108
          %vm2110 = vweird.f32 %v1765
          %vm2111 = vweird.f32 %v2105
          %vm2112 = vmor %vm2110, %vm2111
          %v2113 = vsel %vm2112, %v2105, %v2109
          %v2114 = vand.u32 2147483647, %v1765
          %vm2115 = vcmp.eq.f32.partialorder %v2114, 8.507059e+37
          %v2116 = vand.u32 %v1765, 2147483648
          %v2117 = vor.u32 1.1754944e-38, %v2116
          %v2118 = vsel %vm2115, %v2117, %v2113
          %v2119 = vmul.f32 1.0, %v2118
          %v2120 = vrcp.pop %v1766
          %v2121 = vmul.f32 %v1766, %v2120
          %v2122 = vsub.f32 1.0, %v2121
          %v2123 = vmul.f32 %v2120, %v2122
          %v2124 = vadd.f32 %v2120, %v2123
          %vm2125 = vweird.f32 %v1766
          %vm2126 = vweird.f32 %v2120
          %vm2127 = vmor %vm2125, %vm2126
          %v2128 = vsel %vm2127, %v2120, %v2124
          %v2129 = vand.u32 2147483647, %v1766
          %vm2130 = vcmp.eq.f32.partialorder %v2129, 8.507059e+37
          %v2131 = vand.u32 %v1766, 2147483648
          %v2132 = vor.u32 1.1754944e-38, %v2131
          %v2133 = vsel %vm2130, %v2132, %v2128
          %v2134 = vmul.f32 1.0, %v2133
          %v2135 = vrcp.pop %v1767
          %v2136 = vmul.f32 %v1767, %v2135
          %v2137 = vsub.f32 1.0, %v2136
          %v2138 = vmul.f32 %v2135, %v2137
          %v2139 = vadd.f32 %v2135, %v2138
          %vm2140 = vweird.f32 %v1767
          %vm2141 = vweird.f32 %v2135
          %vm2142 = vmor %vm2140, %vm2141
          %v2143 = vsel %vm2142, %v2135, %v2139
          %v2144 = vand.u32 2147483647, %v1767
          %vm2145 = vcmp.eq.f32.partialorder %v2144, 8.507059e+37
          %v2146 = vand.u32 %v1767, 2147483648
          %v2147 = vor.u32 1.1754944e-38, %v2146
          %v2148 = vsel %vm2145, %v2147, %v2143
          %v2149 = vmul.f32 1.0, %v2148
          %v2150 = vrcp.pop %v1768
          %v2151 = vmul.f32 %v1768, %v2150
          %v2152 = vsub.f32 1.0, %v2151
          %v2153 = vmul.f32 %v2150, %v2152
          %v2154 = vadd.f32 %v2150, %v2153
          %vm2155 = vweird.f32 %v1768
          %vm2156 = vweird.f32 %v2150
          %vm2157 = vmor %vm2155, %vm2156
          %v2158 = vsel %vm2157, %v2150, %v2154
          %v2159 = vand.u32 2147483647, %v1768
          %vm2160 = vcmp.eq.f32.partialorder %v2159, 8.507059e+37
          %v2161 = vand.u32 %v1768, 2147483648
          %v2162 = vor.u32 1.1754944e-38, %v2161
          %v2163 = vsel %vm2160, %v2162, %v2158
          %v2164 = vmul.f32 1.0, %v2163
          %v2165 = vrcp.pop %v1769
          %v2166 = vmul.f32 %v1769, %v2165
          %v2167 = vsub.f32 1.0, %v2166
          %v2168 = vmul.f32 %v2165, %v2167
          %v2169 = vadd.f32 %v2165, %v2168
          %vm2170 = vweird.f32 %v1769
          %vm2171 = vweird.f32 %v2165
          %vm2172 = vmor %vm2170, %vm2171
          %v2173 = vsel %vm2172, %v2165, %v2169
          %v2174 = vand.u32 2147483647, %v1769
          %vm2175 = vcmp.eq.f32.partialorder %v2174, 8.507059e+37
          %v2176 = vand.u32 %v1769, 2147483648
          %v2177 = vor.u32 1.1754944e-38, %v2176
          %v2178 = vsel %vm2175, %v2177, %v2173
          %v2179 = vmul.f32 1.0, %v2178
          %v2180 = vrcp.pop %v1770
          %v2181 = vmul.f32 %v1770, %v2180
          %v2182 = vsub.f32 1.0, %v2181
          %v2183 = vmul.f32 %v2180, %v2182
          %v2184 = vadd.f32 %v2180, %v2183
          %vm2185 = vweird.f32 %v1770
          %vm2186 = vweird.f32 %v2180
          %vm2187 = vmor %vm2185, %vm2186
          %v2188 = vsel %vm2187, %v2180, %v2184
          %v2189 = vand.u32 2147483647, %v1770
          %vm2190 = vcmp.eq.f32.partialorder %v2189, 8.507059e+37
          %v2191 = vand.u32 %v1770, 2147483648
          %v2192 = vor.u32 1.1754944e-38, %v2191
          %v2193 = vsel %vm2190, %v2192, %v2188
          %v2194 = vmul.f32 1.0, %v2193
          %v2195 = vrcp.pop %v1771
          %v2196 = vmul.f32 %v1771, %v2195
          %v2197 = vsub.f32 1.0, %v2196
          %v2198 = vmul.f32 %v2195, %v2197
          %v2199 = vadd.f32 %v2195, %v2198
          %vm2200 = vweird.f32 %v1771
          %vm2201 = vweird.f32 %v2195
          %vm2202 = vmor %vm2200, %vm2201
          %v2203 = vsel %vm2202, %v2195, %v2199
          %v2204 = vand.u32 2147483647, %v1771
          %vm2205 = vcmp.eq.f32.partialorder %v2204, 8.507059e+37
          %v2206 = vand.u32 %v1771, 2147483648
          %v2207 = vor.u32 1.1754944e-38, %v2206
          %v2208 = vsel %vm2205, %v2207, %v2203
          %v2209 = vmul.f32 1.0, %v2208
          %v2210 = vrcp.pop %v1772
          %v2211 = vmul.f32 %v1772, %v2210
          %v2212 = vsub.f32 1.0, %v2211
          %v2213 = vmul.f32 %v2210, %v2212
          %v2214 = vadd.f32 %v2210, %v2213
          %vm2215 = vweird.f32 %v1772
          %vm2216 = vweird.f32 %v2210
          %vm2217 = vmor %vm2215, %vm2216
          %v2218 = vsel %vm2217, %v2210, %v2214
          %v2219 = vand.u32 2147483647, %v1772
          %vm2220 = vcmp.eq.f32.partialorder %v2219, 8.507059e+37
          %v2221 = vand.u32 %v1772, 2147483648
          %v2222 = vor.u32 1.1754944e-38, %v2221
          %v2223 = vsel %vm2220, %v2222, %v2218
          %v2224 = vmul.f32 1.0, %v2223
          %v2225 = vrcp.pop %v1773
          %v2226 = vmul.f32 %v1773, %v2225
          %v2227 = vsub.f32 1.0, %v2226
          %v2228 = vmul.f32 %v2225, %v2227
          %v2229 = vadd.f32 %v2225, %v2228
          %vm2230 = vweird.f32 %v1773
          %vm2231 = vweird.f32 %v2225
          %vm2232 = vmor %vm2230, %vm2231
          %v2233 = vsel %vm2232, %v2225, %v2229
          %v2234 = vand.u32 2147483647, %v1773
          %vm2235 = vcmp.eq.f32.partialorder %v2234, 8.507059e+37
          %v2236 = vand.u32 %v1773, 2147483648
          %v2237 = vor.u32 1.1754944e-38, %v2236
          %v2238 = vsel %vm2235, %v2237, %v2233
          %v2239 = vmul.f32 1.0, %v2238
          %v2240 = vrcp.pop %v1774
          %v2241 = vmul.f32 %v1774, %v2240
          %v2242 = vsub.f32 1.0, %v2241
          %v2243 = vmul.f32 %v2240, %v2242
          %v2244 = vadd.f32 %v2240, %v2243
          %vm2245 = vweird.f32 %v1774
          %vm2246 = vweird.f32 %v2240
          %vm2247 = vmor %vm2245, %vm2246
          %v2248 = vsel %vm2247, %v2240, %v2244
          %v2249 = vand.u32 2147483647, %v1774
          %vm2250 = vcmp.eq.f32.partialorder %v2249, 8.507059e+37
          %v2251 = vand.u32 %v1774, 2147483648
          %v2252 = vor.u32 1.1754944e-38, %v2251
          %v2253 = vsel %vm2250, %v2252, %v2248
          %v2254 = vmul.f32 1.0, %v2253
          %v2255 = vmul.f32 %v1505, %v1789
          %v2256 = vmul.f32 %v1524, %v1804
          %v2257 = vmul.f32 %v1543, %v1819
          %v2258 = vmul.f32 %v1562, %v1834
          %v2259 = vmul.f32 %v1581, %v1849
          %v2260 = vmul.f32 %v1600, %v1864
          %v2261 = vmul.f32 %v1619, %v1879
          %v2262 = vmul.f32 %v1638, %v1894
          %v2263 = vmul.f32 %v1507, %v1909
          %v2264 = vmul.f32 %v1526, %v1924
          %v2265 = vmul.f32 %v1545, %v1939
          %v2266 = vmul.f32 %v1564, %v1954
          %v2267 = vmul.f32 %v1583, %v1969
          %v2268 = vmul.f32 %v1602, %v1984
          %v2269 = vmul.f32 %v1621, %v1999
          %v2270 = vmul.f32 %v1640, %v2014
          %v2271 = vmul.f32 %v1510, %v2029
          %v2272 = vmul.f32 %v1529, %v2044
          %v2273 = vmul.f32 %v1548, %v2059
          %v2274 = vmul.f32 %v1567, %v2074
          %v2275 = vmul.f32 %v1586, %v2089
          %v2276 = vmul.f32 %v1605, %v2104
          %v2277 = vmul.f32 %v1624, %v2119
          %v2278 = vmul.f32 %v1643, %v2134
          %v2279 = vmul.f32 %v1512, %v2149
          %v2280 = vmul.f32 %v1531, %v2164
          %v2281 = vmul.f32 %v1550, %v2179
          %v2282 = vmul.f32 %v1569, %v2194
          %v2283 = vmul.f32 %v1588, %v2209
          %v2284 = vmul.f32 %v1607, %v2224
          %v2285 = vmul.f32 %v1626, %v2239
          %v2286 = vmul.f32 %v1645, %v2254
          %v2287 = vpack.c.bf16 %v2263, %v2255
          %v2288 = vpack.c.bf16 %v2264, %v2256
          %v2289 = vpack.c.bf16 %v2265, %v2257
          %v2290 = vpack.c.bf16 %v2266, %v2258
          %v2291 = vpack.c.bf16 %v2267, %v2259
          %v2292 = vpack.c.bf16 %v2268, %v2260
          %v2293 = vpack.c.bf16 %v2269, %v2261
          %v2294 = vpack.c.bf16 %v2270, %v2262
          %v2295 = vpack.c.bf16 %v2279, %v2271
          %v2296 = vpack.c.bf16 %v2280, %v2272
          %v2297 = vpack.c.bf16 %v2281, %v2273
          %v2298 = vpack.c.bf16 %v2282, %v2274
          %v2299 = vpack.c.bf16 %v2283, %v2275
          %v2300 = vpack.c.bf16 %v2284, %v2276
          %v2301 = vpack.c.bf16 %v2285, %v2277
          %v2302 = vpack.c.bf16 %v2286, %v2278
          %v2305 = vunpack.c.l.b16 %v368
          %v2306 = vunpack.c.l.b16 %v369
          %v2307 = vpack.c.b16 %v2306, %v2305
          %vm2308 = vcmask 261120
          %v2310 = vsel %vm2308, %v2307, 0
          %2312 = vmatpush.bf16.msra.mxu0 0
          %2313 = vmatpush.bf16.msra.mxu0 0
          %2314 = vmatpush.bf16.msra.mxu0 0
          %2315 = vmatpush.bf16.msra.mxu0 0
          %2316 = vmatpush.bf16.msra.mxu0 0
          %2317 = vmatpush.bf16.msra.mxu0 0
          %2318 = vmatpush.bf16.msra.mxu0 %v2295
          %2319 = vmatpush.bf16.msra.mxu0 %v2287
          %2320 = vmatmul.bf16.gmra.mxu0 %v2310
          %v2321 = vpop.f32.mrf.mxu0
          %v2322 = vadd.f32 %v441, %v2321
          %v2323 = vpop.f32.mrf.mxu0
          %v2324 = vadd.f32 %v446, %v2323
          %2325 = vdwg.mxu0
          %2326 = vmatpush.bf16.msra.mxu0 0
          %2327 = vmatpush.bf16.msra.mxu0 0
          %2328 = vmatpush.bf16.msra.mxu0 0
          %2329 = vmatpush.bf16.msra.mxu0 0
          %2330 = vmatpush.bf16.msra.mxu0 0
          %2331 = vmatpush.bf16.msra.mxu0 0
          %2332 = vmatpush.bf16.msra.mxu0 %v2296
          %2333 = vmatpush.bf16.msra.mxu0 %v2288
          %2334 = vmatmul.bf16.gmra.mxu0 %v2310
          %v2335 = vpop.f32.mrf.mxu0
          %v2336 = vadd.f32 %v441, %v2335
          %v2337 = vpop.f32.mrf.mxu0
          %v2338 = vadd.f32 %v446, %v2337
          %2339 = vdwg.mxu0
          %2340 = vmatpush.bf16.msra.mxu0 0
          %2341 = vmatpush.bf16.msra.mxu0 0
          %2342 = vmatpush.bf16.msra.mxu0 0
          %2343 = vmatpush.bf16.msra.mxu0 0
          %2344 = vmatpush.bf16.msra.mxu0 0
          %2345 = vmatpush.bf16.msra.mxu0 0
          %2346 = vmatpush.bf16.msra.mxu0 %v2297
          %2347 = vmatpush.bf16.msra.mxu0 %v2289
          %2348 = vmatmul.bf16.gmra.mxu0 %v2310
          %v2349 = vpop.f32.mrf.mxu0
          %v2350 = vadd.f32 %v441, %v2349
          %v2351 = vpop.f32.mrf.mxu0
          %v2352 = vadd.f32 %v446, %v2351
          %2353 = vdwg.mxu0
          %2354 = vmatpush.bf16.msra.mxu0 0
          %2355 = vmatpush.bf16.msra.mxu0 0
          %2356 = vmatpush.bf16.msra.mxu0 0
          %2357 = vmatpush.bf16.msra.mxu0 0
          %2358 = vmatpush.bf16.msra.mxu0 0
          %2359 = vmatpush.bf16.msra.mxu0 0
          %2360 = vmatpush.bf16.msra.mxu0 %v2298
          %2361 = vmatpush.bf16.msra.mxu0 %v2290
          %2362 = vmatmul.bf16.gmra.mxu0 %v2310
          %v2363 = vpop.f32.mrf.mxu0
          %v2364 = vadd.f32 %v441, %v2363
          %v2365 = vpop.f32.mrf.mxu0
          %v2366 = vadd.f32 %v446, %v2365
          %2367 = vdwg.mxu0
          %2368 = vmatpush.bf16.msra.mxu0 0
          %2369 = vmatpush.bf16.msra.mxu0 0
          %2370 = vmatpush.bf16.msra.mxu0 0
          %2371 = vmatpush.bf16.msra.mxu0 0
          %2372 = vmatpush.bf16.msra.mxu0 0
          %2373 = vmatpush.bf16.msra.mxu0 0
          %2374 = vmatpush.bf16.msra.mxu0 %v2299
          %2375 = vmatpush.bf16.msra.mxu0 %v2291
          %2376 = vmatmul.bf16.gmra.mxu0 %v2310
          %v2377 = vpop.f32.mrf.mxu0
          %v2378 = vadd.f32 %v441, %v2377
          %v2379 = vpop.f32.mrf.mxu0
          %v2380 = vadd.f32 %v446, %v2379
          %2381 = vdwg.mxu0
          %2382 = vmatpush.bf16.msra.mxu0 0
          %2383 = vmatpush.bf16.msra.mxu0 0
          %2384 = vmatpush.bf16.msra.mxu0 0
          %2385 = vmatpush.bf16.msra.mxu0 0
          %2386 = vmatpush.bf16.msra.mxu0 0
          %2387 = vmatpush.bf16.msra.mxu0 0
          %2388 = vmatpush.bf16.msra.mxu0 %v2300
          %2389 = vmatpush.bf16.msra.mxu0 %v2292
          %2390 = vmatmul.bf16.gmra.mxu0 %v2310
          %v2391 = vpop.f32.mrf.mxu0
          %v2392 = vadd.f32 %v441, %v2391
          %v2393 = vpop.f32.mrf.mxu0
          %v2394 = vadd.f32 %v446, %v2393
          %2395 = vdwg.mxu0
          %2396 = vmatpush.bf16.msra.mxu0 0
          %2397 = vmatpush.bf16.msra.mxu0 0
          %2398 = vmatpush.bf16.msra.mxu0 0
          %2399 = vmatpush.bf16.msra.mxu0 0
          %2400 = vmatpush.bf16.msra.mxu0 0
          %2401 = vmatpush.bf16.msra.mxu0 0
          %2402 = vmatpush.bf16.msra.mxu0 %v2301
          %2403 = vmatpush.bf16.msra.mxu0 %v2293
          %2404 = vmatmul.bf16.gmra.mxu0 %v2310
          %v2405 = vpop.f32.mrf.mxu0
          %v2406 = vadd.f32 %v441, %v2405
          %v2407 = vpop.f32.mrf.mxu0
          %v2408 = vadd.f32 %v446, %v2407
          %2409 = vdwg.mxu0
          %2410 = vmatpush.bf16.msra.mxu0 0
          %2411 = vmatpush.bf16.msra.mxu0 0
          %2412 = vmatpush.bf16.msra.mxu0 0
          %2413 = vmatpush.bf16.msra.mxu0 0
          %2414 = vmatpush.bf16.msra.mxu0 0
          %2415 = vmatpush.bf16.msra.mxu0 0
          %2416 = vmatpush.bf16.msra.mxu0 %v2302
          %2417 = vmatpush.bf16.msra.mxu0 %v2294
          %2418 = vmatmul.bf16.gmra.mxu0 %v2310
          %v2419 = vpop.f32.mrf.mxu0
          %v2420 = vadd.f32 %v441, %v2419
          %v2421 = vpop.f32.mrf.mxu0
          %v2422 = vadd.f32 %v446, %v2421
          %2423 = vdwg.mxu0
          %v2424 = vadd.f32 %v1344, %v2322
          %v2425 = vadd.f32 %v1345, %v2336
          %v2426 = vadd.f32 %v1346, %v2350
          %v2427 = vadd.f32 %v1347, %v2364
          %v2428 = vadd.f32 %v1348, %v2378
          %v2429 = vadd.f32 %v1349, %v2392
          %v2430 = vadd.f32 %v1350, %v2406
          %v2431 = vadd.f32 %v1351, %v2420
          %v2432 = vadd.f32 %v1352, %v2324
          %v2433 = vadd.f32 %v1353, %v2338
          %v2434 = vadd.f32 %v1354, %v2352
          %v2435 = vadd.f32 %v1355, %v2366
          %v2436 = vadd.f32 %v1356, %v2380
          %v2437 = vadd.f32 %v1357, %v2394
          %v2438 = vadd.f32 %v1358, %v2408
          %v2439 = vadd.f32 %v1359, %v2422
          %s2440 = smul.addr %s454, 8
          %s2441 = scalar_lea.vmem %s353, %s2440 [#allocation5]
          %2442 = vst [vmem:[%s2441] sm:$0xff] %v2424
          %2443 = vst [vmem:[%s2441 + $0x8] sm:$0xff] %v2425
          %2444 = vst [vmem:[%s2441 + $0x10] sm:$0xff] %v2426
          %2445 = vst [vmem:[%s2441 + $0x18] sm:$0xff] %v2427
          %2446 = vst [vmem:[%s2441 + $0x20] sm:$0xff] %v2428
          %2447 = vst [vmem:[%s2441 + $0x28] sm:$0xff] %v2429
          %2448 = vst [vmem:[%s2441 + $0x30] sm:$0xff] %v2430
          %2449 = vst [vmem:[%s2441 + $0x38] sm:$0xff] %v2431
          %2450 = vst [vmem:[%s2441 + $0x40] sm:$0xff] %v2432
          %2451 = vst [vmem:[%s2441 + $0x48] sm:$0xff] %v2433
          %2452 = vst [vmem:[%s2441 + $0x50] sm:$0xff] %v2434
          %2453 = vst [vmem:[%s2441 + $0x58] sm:$0xff] %v2435
          %2454 = vst [vmem:[%s2441 + $0x60] sm:$0xff] %v2436
          %2455 = vst [vmem:[%s2441 + $0x68] sm:$0xff] %v2437
          %2456 = vst [vmem:[%s2441 + $0x70] sm:$0xff] %v2438
          %2457 = vst [vmem:[%s2441 + $0x78] sm:$0xff] %v2439
        $region65: #{tpu_custom_call.1} parent=55 // loop_footer
          %s453 = sadd.s32 1, %s449
        $region66: #{tpu_custom_call.1} parent=55 // loop_footer_branch
          %448 = sbr.rel target = $region62
        $region67: #{tpu_custom_call.1} parent=55 // loop_exit
          _
        %s2458 = sand.u32 %s228, 1
        %s2459 = scalar_lea.sflag [#allocation4], %s2458
        %s2460 = sand.u32 %s228, 1
        %s2461 = smul.addr %s2460, 512
        %s2462 = scalar_lea.vmem [#allocation5], %s2461
        // Predicated region
        $region68: #{tpu_custom_call.1} parent=55 // pred_check
          %p2463 = pneg %p238
        $region69: #{tpu_custom_call.1} parent=55 // pred_check_branch
          %2465 = sbr.rel (%p2463) target = $region71
        $region70: #{tpu_custom_call.1} parent=55 // pred_region
          %s2466 = smul.u32 4, %s26
          %2468 = vsyncadd %s2459, 0
          %s2469 = smul.addr %s2466, 16
          %s2470 = smul.addr %s2469, 8
          %s2471 = scalar_lea.hbm %s9, %s2470
          %s2472 = sshll.u32 %s2462, 4
          %s2473 = int_to_ptr.vmem [resolvable:$true] %s2472
          %s2474 = sshll.u32 %s2471, 4
          %s2475 = int_to_ptr.hbm [resolvable:$true] %s2474
          %2480 = dma.vmem_to_hbm [thread:$0]  %s2473, 8192, %s2475, %s2459, 1024, 1024, 64
        $region71: #{tpu_custom_call.1} parent=55 // pred_fallthru
          _
      $region56: #{tpu_custom_call.1} parent=5 // pred_fallthru
        _
      %p2481 = scmp.le.s32.totalorder 2, %s21
      // Predicated region
      $region72: #{tpu_custom_call.1} parent=5 // pred_check
        %p2482 = pneg %p2481
      $region73: #{tpu_custom_call.1} parent=5 // pred_check_branch
        %2484 = sbr.rel (%p2482) target = $region75
      $region74: #{tpu_custom_call.1} parent=5 // pred_region
        %s2485 = ssub.s32 %s21, 2
        // Predicated region
        $region76: #{tpu_custom_call.1} parent=74 // pred_check
          %p2486 = pneg %p244
        $region77: #{tpu_custom_call.1} parent=74 // pred_check_branch
          %2488 = sbr.rel (%p2486) target = $region79
        $region78: #{tpu_custom_call.1} parent=74 // pred_region
          %s2489 = sand.u32 %s229, 1
          %s2490 = scalar_lea.sflag [#allocation4], %s2489
          %s2491 = sand.u32 %s229, 1
          %s2492 = smul.addr %s2491, 512
          %s2493 = scalar_lea.vmem [#allocation5], %s2492
          %2495 = dma.done %s2490, 8192
        $region79: #{tpu_custom_call.1} parent=74 // pred_fallthru
          _
      $region75: #{tpu_custom_call.1} parent=5 // pred_fallthru
        _
    $region6: #{tpu_custom_call.1} parent=1 // loop_footer
      %s25 = sadd.s32 1, %s21
    $region7: #{tpu_custom_call.1} parent=1 // loop_footer_branch
      %20 = sbr.rel target = $region3
    $region8: #{tpu_custom_call.1} parent=1 // loop_exit
      _
    %2496 = vsyncpa [#allocation3], 1
    %s2497 = scalar_lea.sflag [#allocation3], 1
    %2498 = vsyncpa %s2497, 1
    %2499 = vsyncpa [#allocation4], 1
    %s2500 = scalar_lea.sflag [#allocation4], 1
    %2501 = vsyncpa %s2500, 1

</llo_original>
